<compile_context>
chip_gen: v6e
topology: v6e:2x2x1
jax: 0.10.0
libtpu: 0.0.40
codegen_flags: <defaults>
</compile_context>

<pallas_src>
import jax
import jax.numpy as jnp
from jax.experimental import pallas as pl
from jax.experimental.pallas import tpu as pltpu


def _embed_kernel(idx_ref, w_ref, o_ref):
    """Vectorized one-hot-select embedding gather, single slab store.

    idx_ref: (N, 1) int32   in VMEM -- unit ids for every token
    w_ref:   (V, D) float32 in VMEM -- full embedding table (single copy)
    o_ref:   (N, D) float32 in VMEM -- gathered rows
    """
    n, d = o_ref.shape
    v = w_ref.shape[0]

    idx = idx_ref[...]                      # (N, 1) int32, lives in vregs
    acc = jnp.zeros((n, d), dtype=o_ref.dtype)

    # V is a small static compile-time constant (64) -> trace-time unrolled.
    # Each iteration is pure 2-D VPU work vectorized over all N tokens:
    #   mask (N,1) = (idx == v);  row (1,D) static load;  select into acc.
    # Exactly one v matches per token, so the final acc row is a bit-exact
    # copy of the selected table row (exact vs. jnp.take; no MXU rounding).
    for row in range(v):
        w_row = w_ref[pl.ds(row, 1), :]     # (1, D) static sublane load
        acc = jnp.where(idx == row, w_row, acc)

    # Single contiguous slab store (2-3 vsts) instead of N masked row stores.
    o_ref[...] = acc


@jax.jit
def embedding_forward(x, weight):
    """x: (B, T) int32 unit ids, weight: (V, D) float32 -> (B, T, D) float32."""
    b, t = x.shape
    v, d = weight.shape
    n = b * t

    # (N, 1) layout: lane-broadcastable compare operand inside the kernel.
    idx = x.reshape(n, 1).astype(jnp.int32)

    out_flat = pl.pallas_call(
        _embed_kernel,
        out_shape=jax.ShapeDtypeStruct((n, d), weight.dtype),
        # No grid: the whole problem is one kernel invocation.
        in_specs=[
            pl.BlockSpec(memory_space=pltpu.MemorySpace.VMEM),   # indices
            pl.BlockSpec(memory_space=pltpu.MemorySpace.VMEM),   # full table
        ],
        out_specs=pl.BlockSpec(memory_space=pltpu.MemorySpace.VMEM),
    )(idx, weight)

    return out_flat.reshape(b, t, d)


def make_embedding_weight(key, input_dim, output_dim):
    """Deterministic stand-in for the np.random.dirichlet row init."""
    w = jax.random.dirichlet(
        key, jnp.ones((output_dim,), jnp.float32), shape=(input_dim,)
    )
    # nn.Embedding weight is float32 (copy_ casts the dirichlet rows).
    return w.astype(jnp.float32)


if __name__ == "__main__":
    num_phonemes = 39
    BLANK_VALUE = num_phonemes + 1          # 40

    input_dim = 64                          # number of discrete units (V)
    output_dim = BLANK_VALUE + 1            # 41 phoneme classes incl. BLANK (D)
    B, T = 2, 8                             # batch of unit-id sequences

    key = jax.random.PRNGKey(0)
    k_w, k_x = jax.random.split(key)

    weight = make_embedding_weight(k_w, input_dim, output_dim)   # (V, D)
    x = jax.random.randint(k_x, (B, T), 0, input_dim, dtype=jnp.int32)

    out = embedding_forward(x, weight)
    out = jax.block_until_ready(out)

    # Reference check: embedding lookup == weight[x] (exact, pure copy/select).
    ref = jnp.take(weight, x, axis=0)
    assert out.shape == (B, T, output_dim), out.shape
    assert jnp.array_equal(out, ref), "mismatch vs. reference gather"

    print("KERNEL_OK")
</pallas_src>

<mosaic_0001>
module attributes {stable_mosaic.version = 11 : i64} {
  func.func @_embed_kernel(%arg0: memref<16x1xi32, #tpu.memory_space<vmem>>, %arg1: memref<64x41xf32, #tpu.memory_space<vmem>>, %arg2: memref<16x41xf32, #tpu.memory_space<vmem>>) attributes {dimension_semantics = [], scalar_prefetch = 0 : i64, scratch_operands = 0 : i64, tpu.core_type = #tpu.core_type<tc>} {
    %c0 = arith.constant 0 : index
    %c0_0 = arith.constant 0 : index
    %0 = vector.load %arg0[%c0, %c0_0] : memref<16x1xi32, #tpu.memory_space<vmem>>, vector<16x1xi32>
    %cst = arith.constant 0.000000e+00 : f32
    %1 = vector.broadcast %cst : f32 to vector<16x41xf32>
    %c0_1 = arith.constant 0 : index
    %c0_2 = arith.constant 0 : index
    %2 = vector.load %arg1[%c0_1, %c0_2] : memref<64x41xf32, #tpu.memory_space<vmem>>, vector<1x41xf32>
    %c0_i32 = arith.constant 0 : i32
    %3 = vector.broadcast %c0_i32 : i32 to vector<16x1xi32>
    %4 = arith.cmpi eq, %0, %3 : vector<16x1xi32>
    %5 = vector.shape_cast %4 : vector<16x1xi1> to vector<16x1xi1>
    %6 = vector.broadcast %5 : vector<16x1xi1> to vector<16x41xi1>
    %7 = vector.shape_cast %2 : vector<1x41xf32> to vector<1x41xf32>
    %8 = vector.broadcast %7 : vector<1x41xf32> to vector<16x41xf32>
    %9 = arith.select %6, %8, %1 : vector<16x41xi1>, vector<16x41xf32>
    %c1 = arith.constant 1 : index
    %c0_3 = arith.constant 0 : index
    %10 = vector.load %arg1[%c1, %c0_3] : memref<64x41xf32, #tpu.memory_space<vmem>>, vector<1x41xf32>
    %c1_i32 = arith.constant 1 : i32
    %11 = vector.broadcast %c1_i32 : i32 to vector<16x1xi32>
    %12 = arith.cmpi eq, %0, %11 : vector<16x1xi32>
    %13 = vector.shape_cast %12 : vector<16x1xi1> to vector<16x1xi1>
    %14 = vector.broadcast %13 : vector<16x1xi1> to vector<16x41xi1>
    %15 = vector.shape_cast %10 : vector<1x41xf32> to vector<1x41xf32>
    %16 = vector.broadcast %15 : vector<1x41xf32> to vector<16x41xf32>
    %17 = arith.select %14, %16, %9 : vector<16x41xi1>, vector<16x41xf32>
    %c2 = arith.constant 2 : index
    %c0_4 = arith.constant 0 : index
    %18 = vector.load %arg1[%c2, %c0_4] : memref<64x41xf32, #tpu.memory_space<vmem>>, vector<1x41xf32>
    %c2_i32 = arith.constant 2 : i32
    %19 = vector.broadcast %c2_i32 : i32 to vector<16x1xi32>
    %20 = arith.cmpi eq, %0, %19 : vector<16x1xi32>
    %21 = vector.shape_cast %20 : vector<16x1xi1> to vector<16x1xi1>
    %22 = vector.broadcast %21 : vector<16x1xi1> to vector<16x41xi1>
    %23 = vector.shape_cast %18 : vector<1x41xf32> to vector<1x41xf32>
    %24 = vector.broadcast %23 : vector<1x41xf32> to vector<16x41xf32>
    %25 = arith.select %22, %24, %17 : vector<16x41xi1>, vector<16x41xf32>
    %c3 = arith.constant 3 : index
    %c0_5 = arith.constant 0 : index
    %26 = vector.load %arg1[%c3, %c0_5] : memref<64x41xf32, #tpu.memory_space<vmem>>, vector<1x41xf32>
    %c3_i32 = arith.constant 3 : i32
    %27 = vector.broadcast %c3_i32 : i32 to vector<16x1xi32>
    %28 = arith.cmpi eq, %0, %27 : vector<16x1xi32>
    %29 = vector.shape_cast %28 : vector<16x1xi1> to vector<16x1xi1>
    %30 = vector.broadcast %29 : vector<16x1xi1> to vector<16x41xi1>
    %31 = vector.shape_cast %26 : vector<1x41xf32> to vector<1x41xf32>
    %32 = vector.broadcast %31 : vector<1x41xf32> to vector<16x41xf32>
    %33 = arith.select %30, %32, %25 : vector<16x41xi1>, vector<16x41xf32>
    %c4 = arith.constant 4 : index
    %c0_6 = arith.constant 0 : index
    %34 = vector.load %arg1[%c4, %c0_6] : memref<64x41xf32, #tpu.memory_space<vmem>>, vector<1x41xf32>
    %c4_i32 = arith.constant 4 : i32
    %35 = vector.broadcast %c4_i32 : i32 to vector<16x1xi32>
    %36 = arith.cmpi eq, %0, %35 : vector<16x1xi32>
    %37 = vector.shape_cast %36 : vector<16x1xi1> to vector<16x1xi1>
    %38 = vector.broadcast %37 : vector<16x1xi1> to vector<16x41xi1>
    %39 = vector.shape_cast %34 : vector<1x41xf32> to vector<1x41xf32>
    %40 = vector.broadcast %39 : vector<1x41xf32> to vector<16x41xf32>
    %41 = arith.select %38, %40, %33 : vector<16x41xi1>, vector<16x41xf32>
    %c5 = arith.constant 5 : index
    %c0_7 = arith.constant 0 : index
    %42 = vector.load %arg1[%c5, %c0_7] : memref<64x41xf32, #tpu.memory_space<vmem>>, vector<1x41xf32>
    %c5_i32 = arith.constant 5 : i32
    %43 = vector.broadcast %c5_i32 : i32 to vector<16x1xi32>
    %44 = arith.cmpi eq, %0, %43 : vector<16x1xi32>
    %45 = vector.shape_cast %44 : vector<16x1xi1> to vector<16x1xi1>
    %46 = vector.broadcast %45 : vector<16x1xi1> to vector<16x41xi1>
    %47 = vector.shape_cast %42 : vector<1x41xf32> to vector<1x41xf32>
    %48 = vector.broadcast %47 : vector<1x41xf32> to vector<16x41xf32>
    %49 = arith.select %46, %48, %41 : vector<16x41xi1>, vector<16x41xf32>
    %c6 = arith.constant 6 : index
    %c0_8 = arith.constant 0 : index
    %50 = vector.load %arg1[%c6, %c0_8] : memref<64x41xf32, #tpu.memory_space<vmem>>, vector<1x41xf32>
    %c6_i32 = arith.constant 6 : i32
    %51 = vector.broadcast %c6_i32 : i32 to vector<16x1xi32>
    %52 = arith.cmpi eq, %0, %51 : vector<16x1xi32>
    %53 = vector.shape_cast %52 : vector<16x1xi1> to vector<16x1xi1>
    %54 = vector.broadcast %53 : vector<16x1xi1> to vector<16x41xi1>
    %55 = vector.shape_cast %50 : vector<1x41xf32> to vector<1x41xf32>
    %56 = vector.broadcast %55 : vector<1x41xf32> to vector<16x41xf32>
    %57 = arith.select %54, %56, %49 : vector<16x41xi1>, vector<16x41xf32>
    %c7 = arith.constant 7 : index
    %c0_9 = arith.constant 0 : index
    %58 = vector.load %arg1[%c7, %c0_9] : memref<64x41xf32, #tpu.memory_space<vmem>>, vector<1x41xf32>
    %c7_i32 = arith.constant 7 : i32
    %59 = vector.broadcast %c7_i32 : i32 to vector<16x1xi32>
    %60 = arith.cmpi eq, %0, %59 : vector<16x1xi32>
    %61 = vector.shape_cast %60 : vector<16x1xi1> to vector<16x1xi1>
    %62 = vector.broadcast %61 : vector<16x1xi1> to vector<16x41xi1>
    %63 = vector.shape_cast %58 : vector<1x41xf32> to vector<1x41xf32>
    %64 = vector.broadcast %63 : vector<1x41xf32> to vector<16x41xf32>
    %65 = arith.select %62, %64, %57 : vector<16x41xi1>, vector<16x41xf32>
    %c8 = arith.constant 8 : index
    %c0_10 = arith.constant 0 : index
    %66 = vector.load %arg1[%c8, %c0_10] : memref<64x41xf32, #tpu.memory_space<vmem>>, vector<1x41xf32>
    %c8_i32 = arith.constant 8 : i32
    %67 = vector.broadcast %c8_i32 : i32 to vector<16x1xi32>
    %68 = arith.cmpi eq, %0, %67 : vector<16x1xi32>
    %69 = vector.shape_cast %68 : vector<16x1xi1> to vector<16x1xi1>
    %70 = vector.broadcast %69 : vector<16x1xi1> to vector<16x41xi1>
    %71 = vector.shape_cast %66 : vector<1x41xf32> to vector<1x41xf32>
    %72 = vector.broadcast %71 : vector<1x41xf32> to vector<16x41xf32>
    %73 = arith.select %70, %72, %65 : vector<16x41xi1>, vector<16x41xf32>
    %c9 = arith.constant 9 : index
    %c0_11 = arith.constant 0 : index
    %74 = vector.load %arg1[%c9, %c0_11] : memref<64x41xf32, #tpu.memory_space<vmem>>, vector<1x41xf32>
    %c9_i32 = arith.constant 9 : i32
    %75 = vector.broadcast %c9_i32 : i32 to vector<16x1xi32>
    %76 = arith.cmpi eq, %0, %75 : vector<16x1xi32>
    %77 = vector.shape_cast %76 : vector<16x1xi1> to vector<16x1xi1>
    %78 = vector.broadcast %77 : vector<16x1xi1> to vector<16x41xi1>
    %79 = vector.shape_cast %74 : vector<1x41xf32> to vector<1x41xf32>
    %80 = vector.broadcast %79 : vector<1x41xf32> to vector<16x41xf32>
    %81 = arith.select %78, %80, %73 : vector<16x41xi1>, vector<16x41xf32>
    %c10 = arith.constant 10 : index
    %c0_12 = arith.constant 0 : index
    %82 = vector.load %arg1[%c10, %c0_12] : memref<64x41xf32, #tpu.memory_space<vmem>>, vector<1x41xf32>
    %c10_i32 = arith.constant 10 : i32
    %83 = vector.broadcast %c10_i32 : i32 to vector<16x1xi32>
    %84 = arith.cmpi eq, %0, %83 : vector<16x1xi32>
    %85 = vector.shape_cast %84 : vector<16x1xi1> to vector<16x1xi1>
    %86 = vector.broadcast %85 : vector<16x1xi1> to vector<16x41xi1>
    %87 = vector.shape_cast %82 : vector<1x41xf32> to vector<1x41xf32>
    %88 = vector.broadcast %87 : vector<1x41xf32> to vector<16x41xf32>
    %89 = arith.select %86, %88, %81 : vector<16x41xi1>, vector<16x41xf32>
    %c11 = arith.constant 11 : index
    %c0_13 = arith.constant 0 : index
    %90 = vector.load %arg1[%c11, %c0_13] : memref<64x41xf32, #tpu.memory_space<vmem>>, vector<1x41xf32>
    %c11_i32 = arith.constant 11 : i32
    %91 = vector.broadcast %c11_i32 : i32 to vector<16x1xi32>
    %92 = arith.cmpi eq, %0, %91 : vector<16x1xi32>
    %93 = vector.shape_cast %92 : vector<16x1xi1> to vector<16x1xi1>
    %94 = vector.broadcast %93 : vector<16x1xi1> to vector<16x41xi1>
    %95 = vector.shape_cast %90 : vector<1x41xf32> to vector<1x41xf32>
    %96 = vector.broadcast %95 : vector<1x41xf32> to vector<16x41xf32>
    %97 = arith.select %94, %96, %89 : vector<16x41xi1>, vector<16x41xf32>
    %c12 = arith.constant 12 : index
    %c0_14 = arith.constant 0 : index
    %98 = vector.load %arg1[%c12, %c0_14] : memref<64x41xf32, #tpu.memory_space<vmem>>, vector<1x41xf32>
    %c12_i32 = arith.constant 12 : i32
    %99 = vector.broadcast %c12_i32 : i32 to vector<16x1xi32>
    %100 = arith.cmpi eq, %0, %99 : vector<16x1xi32>
    %101 = vector.shape_cast %100 : vector<16x1xi1> to vector<16x1xi1>
    %102 = vector.broadcast %101 : vector<16x1xi1> to vector<16x41xi1>
    %103 = vector.shape_cast %98 : vector<1x41xf32> to vector<1x41xf32>
    %104 = vector.broadcast %103 : vector<1x41xf32> to vector<16x41xf32>
    %105 = arith.select %102, %104, %97 : vector<16x41xi1>, vector<16x41xf32>
    %c13 = arith.constant 13 : index
    %c0_15 = arith.constant 0 : index
    %106 = vector.load %arg1[%c13, %c0_15] : memref<64x41xf32, #tpu.memory_space<vmem>>, vector<1x41xf32>
    %c13_i32 = arith.constant 13 : i32
    %107 = vector.broadcast %c13_i32 : i32 to vector<16x1xi32>
    %108 = arith.cmpi eq, %0, %107 : vector<16x1xi32>
    %109 = vector.shape_cast %108 : vector<16x1xi1> to vector<16x1xi1>
    %110 = vector.broadcast %109 : vector<16x1xi1> to vector<16x41xi1>
    %111 = vector.shape_cast %106 : vector<1x41xf32> to vector<1x41xf32>
    %112 = vector.broadcast %111 : vector<1x41xf32> to vector<16x41xf32>
    %113 = arith.select %110, %112, %105 : vector<16x41xi1>, vector<16x41xf32>
    %c14 = arith.constant 14 : index
    %c0_16 = arith.constant 0 : index
    %114 = vector.load %arg1[%c14, %c0_16] : memref<64x41xf32, #tpu.memory_space<vmem>>, vector<1x41xf32>
    %c14_i32 = arith.constant 14 : i32
    %115 = vector.broadcast %c14_i32 : i32 to vector<16x1xi32>
    %116 = arith.cmpi eq, %0, %115 : vector<16x1xi32>
    %117 = vector.shape_cast %116 : vector<16x1xi1> to vector<16x1xi1>
    %118 = vector.broadcast %117 : vector<16x1xi1> to vector<16x41xi1>
    %119 = vector.shape_cast %114 : vector<1x41xf32> to vector<1x41xf32>
    %120 = vector.broadcast %119 : vector<1x41xf32> to vector<16x41xf32>
    %121 = arith.select %118, %120, %113 : vector<16x41xi1>, vector<16x41xf32>
    %c15 = arith.constant 15 : index
    %c0_17 = arith.constant 0 : index
    %122 = vector.load %arg1[%c15, %c0_17] : memref<64x41xf32, #tpu.memory_space<vmem>>, vector<1x41xf32>
    %c15_i32 = arith.constant 15 : i32
    %123 = vector.broadcast %c15_i32 : i32 to vector<16x1xi32>
    %124 = arith.cmpi eq, %0, %123 : vector<16x1xi32>
    %125 = vector.shape_cast %124 : vector<16x1xi1> to vector<16x1xi1>
    %126 = vector.broadcast %125 : vector<16x1xi1> to vector<16x41xi1>
    %127 = vector.shape_cast %122 : vector<1x41xf32> to vector<1x41xf32>
    %128 = vector.broadcast %127 : vector<1x41xf32> to vector<16x41xf32>
    %129 = arith.select %126, %128, %121 : vector<16x41xi1>, vector<16x41xf32>
    %c16 = arith.constant 16 : index
    %c0_18 = arith.constant 0 : index
    %130 = vector.load %arg1[%c16, %c0_18] : memref<64x41xf32, #tpu.memory_space<vmem>>, vector<1x41xf32>
    %c16_i32 = arith.constant 16 : i32
    %131 = vector.broadcast %c16_i32 : i32 to vector<16x1xi32>
    %132 = arith.cmpi eq, %0, %131 : vector<16x1xi32>
    %133 = vector.shape_cast %132 : vector<16x1xi1> to vector<16x1xi1>
    %134 = vector.broadcast %133 : vector<16x1xi1> to vector<16x41xi1>
    %135 = vector.shape_cast %130 : vector<1x41xf32> to vector<1x41xf32>
    %136 = vector.broadcast %135 : vector<1x41xf32> to vector<16x41xf32>
    %137 = arith.select %134, %136, %129 : vector<16x41xi1>, vector<16x41xf32>
    %c17 = arith.constant 17 : index
    %c0_19 = arith.constant 0 : index
    %138 = vector.load %arg1[%c17, %c0_19] : memref<64x41xf32, #tpu.memory_space<vmem>>, vector<1x41xf32>
    %c17_i32 = arith.constant 17 : i32
    %139 = vector.broadcast %c17_i32 : i32 to vector<16x1xi32>
    %140 = arith.cmpi eq, %0, %139 : vector<16x1xi32>
    %141 = vector.shape_cast %140 : vector<16x1xi1> to vector<16x1xi1>
    %142 = vector.broadcast %141 : vector<16x1xi1> to vector<16x41xi1>
    %143 = vector.shape_cast %138 : vector<1x41xf32> to vector<1x41xf32>
    %144 = vector.broadcast %143 : vector<1x41xf32> to vector<16x41xf32>
    %145 = arith.select %142, %144, %137 : vector<16x41xi1>, vector<16x41xf32>
    %c18 = arith.constant 18 : index
    %c0_20 = arith.constant 0 : index
    %146 = vector.load %arg1[%c18, %c0_20] : memref<64x41xf32, #tpu.memory_space<vmem>>, vector<1x41xf32>
    %c18_i32 = arith.constant 18 : i32
    %147 = vector.broadcast %c18_i32 : i32 to vector<16x1xi32>
    %148 = arith.cmpi eq, %0, %147 : vector<16x1xi32>
    %149 = vector.shape_cast %148 : vector<16x1xi1> to vector<16x1xi1>
    %150 = vector.broadcast %149 : vector<16x1xi1> to vector<16x41xi1>
    %151 = vector.shape_cast %146 : vector<1x41xf32> to vector<1x41xf32>
    %152 = vector.broadcast %151 : vector<1x41xf32> to vector<16x41xf32>
    %153 = arith.select %150, %152, %145 : vector<16x41xi1>, vector<16x41xf32>
    %c19 = arith.constant 19 : index
    %c0_21 = arith.constant 0 : index
    %154 = vector.load %arg1[%c19, %c0_21] : memref<64x41xf32, #tpu.memory_space<vmem>>, vector<1x41xf32>
    %c19_i32 = arith.constant 19 : i32
    %155 = vector.broadcast %c19_i32 : i32 to vector<16x1xi32>
    %156 = arith.cmpi eq, %0, %155 : vector<16x1xi32>
    %157 = vector.shape_cast %156 : vector<16x1xi1> to vector<16x1xi1>
    %158 = vector.broadcast %157 : vector<16x1xi1> to vector<16x41xi1>
    %159 = vector.shape_cast %154 : vector<1x41xf32> to vector<1x41xf32>
    %160 = vector.broadcast %159 : vector<1x41xf32> to vector<16x41xf32>
    %161 = arith.select %158, %160, %153 : vector<16x41xi1>, vector<16x41xf32>
    %c20 = arith.constant 20 : index
    %c0_22 = arith.constant 0 : index
    %162 = vector.load %arg1[%c20, %c0_22] : memref<64x41xf32, #tpu.memory_space<vmem>>, vector<1x41xf32>
    %c20_i32 = arith.constant 20 : i32
    %163 = vector.broadcast %c20_i32 : i32 to vector<16x1xi32>
    %164 = arith.cmpi eq, %0, %163 : vector<16x1xi32>
    %165 = vector.shape_cast %164 : vector<16x1xi1> to vector<16x1xi1>
    %166 = vector.broadcast %165 : vector<16x1xi1> to vector<16x41xi1>
    %167 = vector.shape_cast %162 : vector<1x41xf32> to vector<1x41xf32>
    %168 = vector.broadcast %167 : vector<1x41xf32> to vector<16x41xf32>
    %169 = arith.select %166, %168, %161 : vector<16x41xi1>, vector<16x41xf32>
    %c21 = arith.constant 21 : index
    %c0_23 = arith.constant 0 : index
    %170 = vector.load %arg1[%c21, %c0_23] : memref<64x41xf32, #tpu.memory_space<vmem>>, vector<1x41xf32>
    %c21_i32 = arith.constant 21 : i32
    %171 = vector.broadcast %c21_i32 : i32 to vector<16x1xi32>
    %172 = arith.cmpi eq, %0, %171 : vector<16x1xi32>
    %173 = vector.shape_cast %172 : vector<16x1xi1> to vector<16x1xi1>
    %174 = vector.broadcast %173 : vector<16x1xi1> to vector<16x41xi1>
    %175 = vector.shape_cast %170 : vector<1x41xf32> to vector<1x41xf32>
    %176 = vector.broadcast %175 : vector<1x41xf32> to vector<16x41xf32>
    %177 = arith.select %174, %176, %169 : vector<16x41xi1>, vector<16x41xf32>
    %c22 = arith.constant 22 : index
    %c0_24 = arith.constant 0 : index
    %178 = vector.load %arg1[%c22, %c0_24] : memref<64x41xf32, #tpu.memory_space<vmem>>, vector<1x41xf32>
    %c22_i32 = arith.constant 22 : i32
    %179 = vector.broadcast %c22_i32 : i32 to vector<16x1xi32>
    %180 = arith.cmpi eq, %0, %179 : vector<16x1xi32>
    %181 = vector.shape_cast %180 : vector<16x1xi1> to vector<16x1xi1>
    %182 = vector.broadcast %181 : vector<16x1xi1> to vector<16x41xi1>
    %183 = vector.shape_cast %178 : vector<1x41xf32> to vector<1x41xf32>
    %184 = vector.broadcast %183 : vector<1x41xf32> to vector<16x41xf32>
    %185 = arith.select %182, %184, %177 : vector<16x41xi1>, vector<16x41xf32>
    %c23 = arith.constant 23 : index
    %c0_25 = arith.constant 0 : index
    %186 = vector.load %arg1[%c23, %c0_25] : memref<64x41xf32, #tpu.memory_space<vmem>>, vector<1x41xf32>
    %c23_i32 = arith.constant 23 : i32
    %187 = vector.broadcast %c23_i32 : i32 to vector<16x1xi32>
    %188 = arith.cmpi eq, %0, %187 : vector<16x1xi32>
    %189 = vector.shape_cast %188 : vector<16x1xi1> to vector<16x1xi1>
    %190 = vector.broadcast %189 : vector<16x1xi1> to vector<16x41xi1>
    %191 = vector.shape_cast %186 : vector<1x41xf32> to vector<1x41xf32>
    %192 = vector.broadcast %191 : vector<1x41xf32> to vector<16x41xf32>
    %193 = arith.select %190, %192, %185 : vector<16x41xi1>, vector<16x41xf32>
    %c24 = arith.constant 24 : index
    %c0_26 = arith.constant 0 : index
    %194 = vector.load %arg1[%c24, %c0_26] : memref<64x41xf32, #tpu.memory_space<vmem>>, vector<1x41xf32>
    %c24_i32 = arith.constant 24 : i32
    %195 = vector.broadcast %c24_i32 : i32 to vector<16x1xi32>
    %196 = arith.cmpi eq, %0, %195 : vector<16x1xi32>
    %197 = vector.shape_cast %196 : vector<16x1xi1> to vector<16x1xi1>
    %198 = vector.broadcast %197 : vector<16x1xi1> to vector<16x41xi1>
    %199 = vector.shape_cast %194 : vector<1x41xf32> to vector<1x41xf32>
    %200 = vector.broadcast %199 : vector<1x41xf32> to vector<16x41xf32>
    %201 = arith.select %198, %200, %193 : vector<16x41xi1>, vector<16x41xf32>
    %c25 = arith.constant 25 : index
    %c0_27 = arith.constant 0 : index
    %202 = vector.load %arg1[%c25, %c0_27] : memref<64x41xf32, #tpu.memory_space<vmem>>, vector<1x41xf32>
    %c25_i32 = arith.constant 25 : i32
    %203 = vector.broadcast %c25_i32 : i32 to vector<16x1xi32>
    %204 = arith.cmpi eq, %0, %203 : vector<16x1xi32>
    %205 = vector.shape_cast %204 : vector<16x1xi1> to vector<16x1xi1>
    %206 = vector.broadcast %205 : vector<16x1xi1> to vector<16x41xi1>
    %207 = vector.shape_cast %202 : vector<1x41xf32> to vector<1x41xf32>
    %208 = vector.broadcast %207 : vector<1x41xf32> to vector<16x41xf32>
    %209 = arith.select %206, %208, %201 : vector<16x41xi1>, vector<16x41xf32>
    %c26 = arith.constant 26 : index
    %c0_28 = arith.constant 0 : index
    %210 = vector.load %arg1[%c26, %c0_28] : memref<64x41xf32, #tpu.memory_space<vmem>>, vector<1x41xf32>
    %c26_i32 = arith.constant 26 : i32
    %211 = vector.broadcast %c26_i32 : i32 to vector<16x1xi32>
    %212 = arith.cmpi eq, %0, %211 : vector<16x1xi32>
    %213 = vector.shape_cast %212 : vector<16x1xi1> to vector<16x1xi1>
    %214 = vector.broadcast %213 : vector<16x1xi1> to vector<16x41xi1>
    %215 = vector.shape_cast %210 : vector<1x41xf32> to vector<1x41xf32>
    %216 = vector.broadcast %215 : vector<1x41xf32> to vector<16x41xf32>
    %217 = arith.select %214, %216, %209 : vector<16x41xi1>, vector<16x41xf32>
    %c27 = arith.constant 27 : index
    %c0_29 = arith.constant 0 : index
    %218 = vector.load %arg1[%c27, %c0_29] : memref<64x41xf32, #tpu.memory_space<vmem>>, vector<1x41xf32>
    %c27_i32 = arith.constant 27 : i32
    %219 = vector.broadcast %c27_i32 : i32 to vector<16x1xi32>
    %220 = arith.cmpi eq, %0, %219 : vector<16x1xi32>
    %221 = vector.shape_cast %220 : vector<16x1xi1> to vector<16x1xi1>
    %222 = vector.broadcast %221 : vector<16x1xi1> to vector<16x41xi1>
    %223 = vector.shape_cast %218 : vector<1x41xf32> to vector<1x41xf32>
    %224 = vector.broadcast %223 : vector<1x41xf32> to vector<16x41xf32>
    %225 = arith.select %222, %224, %217 : vector<16x41xi1>, vector<16x41xf32>
    %c28 = arith.constant 28 : index
    %c0_30 = arith.constant 0 : index
    %226 = vector.load %arg1[%c28, %c0_30] : memref<64x41xf32, #tpu.memory_space<vmem>>, vector<1x41xf32>
    %c28_i32 = arith.constant 28 : i32
    %227 = vector.broadcast %c28_i32 : i32 to vector<16x1xi32>
    %228 = arith.cmpi eq, %0, %227 : vector<16x1xi32>
    %229 = vector.shape_cast %228 : vector<16x1xi1> to vector<16x1xi1>
    %230 = vector.broadcast %229 : vector<16x1xi1> to vector<16x41xi1>
    %231 = vector.shape_cast %226 : vector<1x41xf32> to vector<1x41xf32>
    %232 = vector.broadcast %231 : vector<1x41xf32> to vector<16x41xf32>
    %233 = arith.select %230, %232, %225 : vector<16x41xi1>, vector<16x41xf32>
    %c29 = arith.constant 29 : index
    %c0_31 = arith.constant 0 : index
    %234 = vector.load %arg1[%c29, %c0_31] : memref<64x41xf32, #tpu.memory_space<vmem>>, vector<1x41xf32>
    %c29_i32 = arith.constant 29 : i32
    %235 = vector.broadcast %c29_i32 : i32 to vector<16x1xi32>
    %236 = arith.cmpi eq, %0, %235 : vector<16x1xi32>
    %237 = vector.shape_cast %236 : vector<16x1xi1> to vector<16x1xi1>
    %238 = vector.broadcast %237 : vector<16x1xi1> to vector<16x41xi1>
    %239 = vector.shape_cast %234 : vector<1x41xf32> to vector<1x41xf32>
    %240 = vector.broadcast %239 : vector<1x41xf32> to vector<16x41xf32>
    %241 = arith.select %238, %240, %233 : vector<16x41xi1>, vector<16x41xf32>
    %c30 = arith.constant 30 : index
    %c0_32 = arith.constant 0 : index
    %242 = vector.load %arg1[%c30, %c0_32] : memref<64x41xf32, #tpu.memory_space<vmem>>, vector<1x41xf32>
    %c30_i32 = arith.constant 30 : i32
    %243 = vector.broadcast %c30_i32 : i32 to vector<16x1xi32>
    %244 = arith.cmpi eq, %0, %243 : vector<16x1xi32>
    %245 = vector.shape_cast %244 : vector<16x1xi1> to vector<16x1xi1>
    %246 = vector.broadcast %245 : vector<16x1xi1> to vector<16x41xi1>
    %247 = vector.shape_cast %242 : vector<1x41xf32> to vector<1x41xf32>
    %248 = vector.broadcast %247 : vector<1x41xf32> to vector<16x41xf32>
    %249 = arith.select %246, %248, %241 : vector<16x41xi1>, vector<16x41xf32>
    %c31 = arith.constant 31 : index
    %c0_33 = arith.constant 0 : index
    %250 = vector.load %arg1[%c31, %c0_33] : memref<64x41xf32, #tpu.memory_space<vmem>>, vector<1x41xf32>
    %c31_i32 = arith.constant 31 : i32
    %251 = vector.broadcast %c31_i32 : i32 to vector<16x1xi32>
    %252 = arith.cmpi eq, %0, %251 : vector<16x1xi32>
    %253 = vector.shape_cast %252 : vector<16x1xi1> to vector<16x1xi1>
    %254 = vector.broadcast %253 : vector<16x1xi1> to vector<16x41xi1>
    %255 = vector.shape_cast %250 : vector<1x41xf32> to vector<1x41xf32>
    %256 = vector.broadcast %255 : vector<1x41xf32> to vector<16x41xf32>
    %257 = arith.select %254, %256, %249 : vector<16x41xi1>, vector<16x41xf32>
    %c32 = arith.constant 32 : index
    %c0_34 = arith.constant 0 : index
    %258 = vector.load %arg1[%c32, %c0_34] : memref<64x41xf32, #tpu.memory_space<vmem>>, vector<1x41xf32>
    %c32_i32 = arith.constant 32 : i32
    %259 = vector.broadcast %c32_i32 : i32 to vector<16x1xi32>
    %260 = arith.cmpi eq, %0, %259 : vector<16x1xi32>
    %261 = vector.shape_cast %260 : vector<16x1xi1> to vector<16x1xi1>
    %262 = vector.broadcast %261 : vector<16x1xi1> to vector<16x41xi1>
    %263 = vector.shape_cast %258 : vector<1x41xf32> to vector<1x41xf32>
    %264 = vector.broadcast %263 : vector<1x41xf32> to vector<16x41xf32>
    %265 = arith.select %262, %264, %257 : vector<16x41xi1>, vector<16x41xf32>
    %c33 = arith.constant 33 : index
    %c0_35 = arith.constant 0 : index
    %266 = vector.load %arg1[%c33, %c0_35] : memref<64x41xf32, #tpu.memory_space<vmem>>, vector<1x41xf32>
    %c33_i32 = arith.constant 33 : i32
    %267 = vector.broadcast %c33_i32 : i32 to vector<16x1xi32>
    %268 = arith.cmpi eq, %0, %267 : vector<16x1xi32>
    %269 = vector.shape_cast %268 : vector<16x1xi1> to vector<16x1xi1>
    %270 = vector.broadcast %269 : vector<16x1xi1> to vector<16x41xi1>
    %271 = vector.shape_cast %266 : vector<1x41xf32> to vector<1x41xf32>
    %272 = vector.broadcast %271 : vector<1x41xf32> to vector<16x41xf32>
    %273 = arith.select %270, %272, %265 : vector<16x41xi1>, vector<16x41xf32>
    %c34 = arith.constant 34 : index
    %c0_36 = arith.constant 0 : index
    %274 = vector.load %arg1[%c34, %c0_36] : memref<64x41xf32, #tpu.memory_space<vmem>>, vector<1x41xf32>
    %c34_i32 = arith.constant 34 : i32
    %275 = vector.broadcast %c34_i32 : i32 to vector<16x1xi32>
    %276 = arith.cmpi eq, %0, %275 : vector<16x1xi32>
    %277 = vector.shape_cast %276 : vector<16x1xi1> to vector<16x1xi1>
    %278 = vector.broadcast %277 : vector<16x1xi1> to vector<16x41xi1>
    %279 = vector.shape_cast %274 : vector<1x41xf32> to vector<1x41xf32>
    %280 = vector.broadcast %279 : vector<1x41xf32> to vector<16x41xf32>
    %281 = arith.select %278, %280, %273 : vector<16x41xi1>, vector<16x41xf32>
    %c35 = arith.constant 35 : index
    %c0_37 = arith.constant 0 : index
    %282 = vector.load %arg1[%c35, %c0_37] : memref<64x41xf32, #tpu.memory_space<vmem>>, vector<1x41xf32>
    %c35_i32 = arith.constant 35 : i32
    %283 = vector.broadcast %c35_i32 : i32 to vector<16x1xi32>
    %284 = arith.cmpi eq, %0, %283 : vector<16x1xi32>
    %285 = vector.shape_cast %284 : vector<16x1xi1> to vector<16x1xi1>
    %286 = vector.broadcast %285 : vector<16x1xi1> to vector<16x41xi1>
    %287 = vector.shape_cast %282 : vector<1x41xf32> to vector<1x41xf32>
    %288 = vector.broadcast %287 : vector<1x41xf32> to vector<16x41xf32>
    %289 = arith.select %286, %288, %281 : vector<16x41xi1>, vector<16x41xf32>
    %c36 = arith.constant 36 : index
    %c0_38 = arith.constant 0 : index
    %290 = vector.load %arg1[%c36, %c0_38] : memref<64x41xf32, #tpu.memory_space<vmem>>, vector<1x41xf32>
    %c36_i32 = arith.constant 36 : i32
    %291 = vector.broadcast %c36_i32 : i32 to vector<16x1xi32>
    %292 = arith.cmpi eq, %0, %291 : vector<16x1xi32>
    %293 = vector.shape_cast %292 : vector<16x1xi1> to vector<16x1xi1>
    %294 = vector.broadcast %293 : vector<16x1xi1> to vector<16x41xi1>
    %295 = vector.shape_cast %290 : vector<1x41xf32> to vector<1x41xf32>
    %296 = vector.broadcast %295 : vector<1x41xf32> to vector<16x41xf32>
    %297 = arith.select %294, %296, %289 : vector<16x41xi1>, vector<16x41xf32>
    %c37 = arith.constant 37 : index
    %c0_39 = arith.constant 0 : index
    %298 = vector.load %arg1[%c37, %c0_39] : memref<64x41xf32, #tpu.memory_space<vmem>>, vector<1x41xf32>
    %c37_i32 = arith.constant 37 : i32
    %299 = vector.broadcast %c37_i32 : i32 to vector<16x1xi32>
    %300 = arith.cmpi eq, %0, %299 : vector<16x1xi32>
    %301 = vector.shape_cast %300 : vector<16x1xi1> to vector<16x1xi1>
    %302 = vector.broadcast %301 : vector<16x1xi1> to vector<16x41xi1>
    %303 = vector.shape_cast %298 : vector<1x41xf32> to vector<1x41xf32>
    %304 = vector.broadcast %303 : vector<1x41xf32> to vector<16x41xf32>
    %305 = arith.select %302, %304, %297 : vector<16x41xi1>, vector<16x41xf32>
    %c38 = arith.constant 38 : index
    %c0_40 = arith.constant 0 : index
    %306 = vector.load %arg1[%c38, %c0_40] : memref<64x41xf32, #tpu.memory_space<vmem>>, vector<1x41xf32>
    %c38_i32 = arith.constant 38 : i32
    %307 = vector.broadcast %c38_i32 : i32 to vector<16x1xi32>
    %308 = arith.cmpi eq, %0, %307 : vector<16x1xi32>
    %309 = vector.shape_cast %308 : vector<16x1xi1> to vector<16x1xi1>
    %310 = vector.broadcast %309 : vector<16x1xi1> to vector<16x41xi1>
    %311 = vector.shape_cast %306 : vector<1x41xf32> to vector<1x41xf32>
    %312 = vector.broadcast %311 : vector<1x41xf32> to vector<16x41xf32>
    %313 = arith.select %310, %312, %305 : vector<16x41xi1>, vector<16x41xf32>
    %c39 = arith.constant 39 : index
    %c0_41 = arith.constant 0 : index
    %314 = vector.load %arg1[%c39, %c0_41] : memref<64x41xf32, #tpu.memory_space<vmem>>, vector<1x41xf32>
    %c39_i32 = arith.constant 39 : i32
    %315 = vector.broadcast %c39_i32 : i32 to vector<16x1xi32>
    %316 = arith.cmpi eq, %0, %315 : vector<16x1xi32>
    %317 = vector.shape_cast %316 : vector<16x1xi1> to vector<16x1xi1>
    %318 = vector.broadcast %317 : vector<16x1xi1> to vector<16x41xi1>
    %319 = vector.shape_cast %314 : vector<1x41xf32> to vector<1x41xf32>
    %320 = vector.broadcast %319 : vector<1x41xf32> to vector<16x41xf32>
    %321 = arith.select %318, %320, %313 : vector<16x41xi1>, vector<16x41xf32>
    %c40 = arith.constant 40 : index
    %c0_42 = arith.constant 0 : index
    %322 = vector.load %arg1[%c40, %c0_42] : memref<64x41xf32, #tpu.memory_space<vmem>>, vector<1x41xf32>
    %c40_i32 = arith.constant 40 : i32
    %323 = vector.broadcast %c40_i32 : i32 to vector<16x1xi32>
    %324 = arith.cmpi eq, %0, %323 : vector<16x1xi32>
    %325 = vector.shape_cast %324 : vector<16x1xi1> to vector<16x1xi1>
    %326 = vector.broadcast %325 : vector<16x1xi1> to vector<16x41xi1>
    %327 = vector.shape_cast %322 : vector<1x41xf32> to vector<1x41xf32>
    %328 = vector.broadcast %327 : vector<1x41xf32> to vector<16x41xf32>
    %329 = arith.select %326, %328, %321 : vector<16x41xi1>, vector<16x41xf32>
    %c41 = arith.constant 41 : index
    %c0_43 = arith.constant 0 : index
    %330 = vector.load %arg1[%c41, %c0_43] : memref<64x41xf32, #tpu.memory_space<vmem>>, vector<1x41xf32>
    %c41_i32 = arith.constant 41 : i32
    %331 = vector.broadcast %c41_i32 : i32 to vector<16x1xi32>
    %332 = arith.cmpi eq, %0, %331 : vector<16x1xi32>
    %333 = vector.shape_cast %332 : vector<16x1xi1> to vector<16x1xi1>
    %334 = vector.broadcast %333 : vector<16x1xi1> to vector<16x41xi1>
    %335 = vector.shape_cast %330 : vector<1x41xf32> to vector<1x41xf32>
    %336 = vector.broadcast %335 : vector<1x41xf32> to vector<16x41xf32>
    %337 = arith.select %334, %336, %329 : vector<16x41xi1>, vector<16x41xf32>
    %c42 = arith.constant 42 : index
    %c0_44 = arith.constant 0 : index
    %338 = vector.load %arg1[%c42, %c0_44] : memref<64x41xf32, #tpu.memory_space<vmem>>, vector<1x41xf32>
    %c42_i32 = arith.constant 42 : i32
    %339 = vector.broadcast %c42_i32 : i32 to vector<16x1xi32>
    %340 = arith.cmpi eq, %0, %339 : vector<16x1xi32>
    %341 = vector.shape_cast %340 : vector<16x1xi1> to vector<16x1xi1>
    %342 = vector.broadcast %341 : vector<16x1xi1> to vector<16x41xi1>
    %343 = vector.shape_cast %338 : vector<1x41xf32> to vector<1x41xf32>
    %344 = vector.broadcast %343 : vector<1x41xf32> to vector<16x41xf32>
    %345 = arith.select %342, %344, %337 : vector<16x41xi1>, vector<16x41xf32>
    %c43 = arith.constant 43 : index
    %c0_45 = arith.constant 0 : index
    %346 = vector.load %arg1[%c43, %c0_45] : memref<64x41xf32, #tpu.memory_space<vmem>>, vector<1x41xf32>
    %c43_i32 = arith.constant 43 : i32
    %347 = vector.broadcast %c43_i32 : i32 to vector<16x1xi32>
    %348 = arith.cmpi eq, %0, %347 : vector<16x1xi32>
    %349 = vector.shape_cast %348 : vector<16x1xi1> to vector<16x1xi1>
    %350 = vector.broadcast %349 : vector<16x1xi1> to vector<16x41xi1>
    %351 = vector.shape_cast %346 : vector<1x41xf32> to vector<1x41xf32>
    %352 = vector.broadcast %351 : vector<1x41xf32> to vector<16x41xf32>
    %353 = arith.select %350, %352, %345 : vector<16x41xi1>, vector<16x41xf32>
    %c44 = arith.constant 44 : index
    %c0_46 = arith.constant 0 : index
    %354 = vector.load %arg1[%c44, %c0_46] : memref<64x41xf32, #tpu.memory_space<vmem>>, vector<1x41xf32>
    %c44_i32 = arith.constant 44 : i32
    %355 = vector.broadcast %c44_i32 : i32 to vector<16x1xi32>
    %356 = arith.cmpi eq, %0, %355 : vector<16x1xi32>
    %357 = vector.shape_cast %356 : vector<16x1xi1> to vector<16x1xi1>
    %358 = vector.broadcast %357 : vector<16x1xi1> to vector<16x41xi1>
    %359 = vector.shape_cast %354 : vector<1x41xf32> to vector<1x41xf32>
    %360 = vector.broadcast %359 : vector<1x41xf32> to vector<16x41xf32>
    %361 = arith.select %358, %360, %353 : vector<16x41xi1>, vector<16x41xf32>
    %c45 = arith.constant 45 : index
    %c0_47 = arith.constant 0 : index
    %362 = vector.load %arg1[%c45, %c0_47] : memref<64x41xf32, #tpu.memory_space<vmem>>, vector<1x41xf32>
    %c45_i32 = arith.constant 45 : i32
    %363 = vector.broadcast %c45_i32 : i32 to vector<16x1xi32>
    %364 = arith.cmpi eq, %0, %363 : vector<16x1xi32>
    %365 = vector.shape_cast %364 : vector<16x1xi1> to vector<16x1xi1>
    %366 = vector.broadcast %365 : vector<16x1xi1> to vector<16x41xi1>
    %367 = vector.shape_cast %362 : vector<1x41xf32> to vector<1x41xf32>
    %368 = vector.broadcast %367 : vector<1x41xf32> to vector<16x41xf32>
    %369 = arith.select %366, %368, %361 : vector<16x41xi1>, vector<16x41xf32>
    %c46 = arith.constant 46 : index
    %c0_48 = arith.constant 0 : index
    %370 = vector.load %arg1[%c46, %c0_48] : memref<64x41xf32, #tpu.memory_space<vmem>>, vector<1x41xf32>
    %c46_i32 = arith.constant 46 : i32
    %371 = vector.broadcast %c46_i32 : i32 to vector<16x1xi32>
    %372 = arith.cmpi eq, %0, %371 : vector<16x1xi32>
    %373 = vector.shape_cast %372 : vector<16x1xi1> to vector<16x1xi1>
    %374 = vector.broadcast %373 : vector<16x1xi1> to vector<16x41xi1>
    %375 = vector.shape_cast %370 : vector<1x41xf32> to vector<1x41xf32>
    %376 = vector.broadcast %375 : vector<1x41xf32> to vector<16x41xf32>
    %377 = arith.select %374, %376, %369 : vector<16x41xi1>, vector<16x41xf32>
    %c47 = arith.constant 47 : index
    %c0_49 = arith.constant 0 : index
    %378 = vector.load %arg1[%c47, %c0_49] : memref<64x41xf32, #tpu.memory_space<vmem>>, vector<1x41xf32>
    %c47_i32 = arith.constant 47 : i32
    %379 = vector.broadcast %c47_i32 : i32 to vector<16x1xi32>
    %380 = arith.cmpi eq, %0, %379 : vector<16x1xi32>
    %381 = vector.shape_cast %380 : vector<16x1xi1> to vector<16x1xi1>
    %382 = vector.broadcast %381 : vector<16x1xi1> to vector<16x41xi1>
    %383 = vector.shape_cast %378 : vector<1x41xf32> to vector<1x41xf32>
    %384 = vector.broadcast %383 : vector<1x41xf32> to vector<16x41xf32>
    %385 = arith.select %382, %384, %377 : vector<16x41xi1>, vector<16x41xf32>
    %c48 = arith.constant 48 : index
    %c0_50 = arith.constant 0 : index
    %386 = vector.load %arg1[%c48, %c0_50] : memref<64x41xf32, #tpu.memory_space<vmem>>, vector<1x41xf32>
    %c48_i32 = arith.constant 48 : i32
    %387 = vector.broadcast %c48_i32 : i32 to vector<16x1xi32>
    %388 = arith.cmpi eq, %0, %387 : vector<16x1xi32>
    %389 = vector.shape_cast %388 : vector<16x1xi1> to vector<16x1xi1>
    %390 = vector.broadcast %389 : vector<16x1xi1> to vector<16x41xi1>
    %391 = vector.shape_cast %386 : vector<1x41xf32> to vector<1x41xf32>
    %392 = vector.broadcast %391 : vector<1x41xf32> to vector<16x41xf32>
    %393 = arith.select %390, %392, %385 : vector<16x41xi1>, vector<16x41xf32>
    %c49 = arith.constant 49 : index
    %c0_51 = arith.constant 0 : index
    %394 = vector.load %arg1[%c49, %c0_51] : memref<64x41xf32, #tpu.memory_space<vmem>>, vector<1x41xf32>
    %c49_i32 = arith.constant 49 : i32
    %395 = vector.broadcast %c49_i32 : i32 to vector<16x1xi32>
    %396 = arith.cmpi eq, %0, %395 : vector<16x1xi32>
    %397 = vector.shape_cast %396 : vector<16x1xi1> to vector<16x1xi1>
    %398 = vector.broadcast %397 : vector<16x1xi1> to vector<16x41xi1>
    %399 = vector.shape_cast %394 : vector<1x41xf32> to vector<1x41xf32>
    %400 = vector.broadcast %399 : vector<1x41xf32> to vector<16x41xf32>
    %401 = arith.select %398, %400, %393 : vector<16x41xi1>, vector<16x41xf32>
    %c50 = arith.constant 50 : index
    %c0_52 = arith.constant 0 : index
    %402 = vector.load %arg1[%c50, %c0_52] : memref<64x41xf32, #tpu.memory_space<vmem>>, vector<1x41xf32>
    %c50_i32 = arith.constant 50 : i32
    %403 = vector.broadcast %c50_i32 : i32 to vector<16x1xi32>
    %404 = arith.cmpi eq, %0, %403 : vector<16x1xi32>
    %405 = vector.shape_cast %404 : vector<16x1xi1> to vector<16x1xi1>
    %406 = vector.broadcast %405 : vector<16x1xi1> to vector<16x41xi1>
    %407 = vector.shape_cast %402 : vector<1x41xf32> to vector<1x41xf32>
    %408 = vector.broadcast %407 : vector<1x41xf32> to vector<16x41xf32>
    %409 = arith.select %406, %408, %401 : vector<16x41xi1>, vector<16x41xf32>
    %c51 = arith.constant 51 : index
    %c0_53 = arith.constant 0 : index
    %410 = vector.load %arg1[%c51, %c0_53] : memref<64x41xf32, #tpu.memory_space<vmem>>, vector<1x41xf32>
    %c51_i32 = arith.constant 51 : i32
    %411 = vector.broadcast %c51_i32 : i32 to vector<16x1xi32>
    %412 = arith.cmpi eq, %0, %411 : vector<16x1xi32>
    %413 = vector.shape_cast %412 : vector<16x1xi1> to vector<16x1xi1>
    %414 = vector.broadcast %413 : vector<16x1xi1> to vector<16x41xi1>
    %415 = vector.shape_cast %410 : vector<1x41xf32> to vector<1x41xf32>
    %416 = vector.broadcast %415 : vector<1x41xf32> to vector<16x41xf32>
    %417 = arith.select %414, %416, %409 : vector<16x41xi1>, vector<16x41xf32>
    %c52 = arith.constant 52 : index
    %c0_54 = arith.constant 0 : index
    %418 = vector.load %arg1[%c52, %c0_54] : memref<64x41xf32, #tpu.memory_space<vmem>>, vector<1x41xf32>
    %c52_i32 = arith.constant 52 : i32
    %419 = vector.broadcast %c52_i32 : i32 to vector<16x1xi32>
    %420 = arith.cmpi eq, %0, %419 : vector<16x1xi32>
    %421 = vector.shape_cast %420 : vector<16x1xi1> to vector<16x1xi1>
    %422 = vector.broadcast %421 : vector<16x1xi1> to vector<16x41xi1>
    %423 = vector.shape_cast %418 : vector<1x41xf32> to vector<1x41xf32>
    %424 = vector.broadcast %423 : vector<1x41xf32> to vector<16x41xf32>
    %425 = arith.select %422, %424, %417 : vector<16x41xi1>, vector<16x41xf32>
    %c53 = arith.constant 53 : index
    %c0_55 = arith.constant 0 : index
    %426 = vector.load %arg1[%c53, %c0_55] : memref<64x41xf32, #tpu.memory_space<vmem>>, vector<1x41xf32>
    %c53_i32 = arith.constant 53 : i32
    %427 = vector.broadcast %c53_i32 : i32 to vector<16x1xi32>
    %428 = arith.cmpi eq, %0, %427 : vector<16x1xi32>
    %429 = vector.shape_cast %428 : vector<16x1xi1> to vector<16x1xi1>
    %430 = vector.broadcast %429 : vector<16x1xi1> to vector<16x41xi1>
    %431 = vector.shape_cast %426 : vector<1x41xf32> to vector<1x41xf32>
    %432 = vector.broadcast %431 : vector<1x41xf32> to vector<16x41xf32>
    %433 = arith.select %430, %432, %425 : vector<16x41xi1>, vector<16x41xf32>
    %c54 = arith.constant 54 : index
    %c0_56 = arith.constant 0 : index
    %434 = vector.load %arg1[%c54, %c0_56] : memref<64x41xf32, #tpu.memory_space<vmem>>, vector<1x41xf32>
    %c54_i32 = arith.constant 54 : i32
    %435 = vector.broadcast %c54_i32 : i32 to vector<16x1xi32>
    %436 = arith.cmpi eq, %0, %435 : vector<16x1xi32>
    %437 = vector.shape_cast %436 : vector<16x1xi1> to vector<16x1xi1>
    %438 = vector.broadcast %437 : vector<16x1xi1> to vector<16x41xi1>
    %439 = vector.shape_cast %434 : vector<1x41xf32> to vector<1x41xf32>
    %440 = vector.broadcast %439 : vector<1x41xf32> to vector<16x41xf32>
    %441 = arith.select %438, %440, %433 : vector<16x41xi1>, vector<16x41xf32>
    %c55 = arith.constant 55 : index
    %c0_57 = arith.constant 0 : index
    %442 = vector.load %arg1[%c55, %c0_57] : memref<64x41xf32, #tpu.memory_space<vmem>>, vector<1x41xf32>
    %c55_i32 = arith.constant 55 : i32
    %443 = vector.broadcast %c55_i32 : i32 to vector<16x1xi32>
    %444 = arith.cmpi eq, %0, %443 : vector<16x1xi32>
    %445 = vector.shape_cast %444 : vector<16x1xi1> to vector<16x1xi1>
    %446 = vector.broadcast %445 : vector<16x1xi1> to vector<16x41xi1>
    %447 = vector.shape_cast %442 : vector<1x41xf32> to vector<1x41xf32>
    %448 = vector.broadcast %447 : vector<1x41xf32> to vector<16x41xf32>
    %449 = arith.select %446, %448, %441 : vector<16x41xi1>, vector<16x41xf32>
    %c56 = arith.constant 56 : index
    %c0_58 = arith.constant 0 : index
    %450 = vector.load %arg1[%c56, %c0_58] : memref<64x41xf32, #tpu.memory_space<vmem>>, vector<1x41xf32>
    %c56_i32 = arith.constant 56 : i32
    %451 = vector.broadcast %c56_i32 : i32 to vector<16x1xi32>
    %452 = arith.cmpi eq, %0, %451 : vector<16x1xi32>
    %453 = vector.shape_cast %452 : vector<16x1xi1> to vector<16x1xi1>
    %454 = vector.broadcast %453 : vector<16x1xi1> to vector<16x41xi1>
    %455 = vector.shape_cast %450 : vector<1x41xf32> to vector<1x41xf32>
    %456 = vector.broadcast %455 : vector<1x41xf32> to vector<16x41xf32>
    %457 = arith.select %454, %456, %449 : vector<16x41xi1>, vector<16x41xf32>
    %c57 = arith.constant 57 : index
    %c0_59 = arith.constant 0 : index
    %458 = vector.load %arg1[%c57, %c0_59] : memref<64x41xf32, #tpu.memory_space<vmem>>, vector<1x41xf32>
    %c57_i32 = arith.constant 57 : i32
    %459 = vector.broadcast %c57_i32 : i32 to vector<16x1xi32>
    %460 = arith.cmpi eq, %0, %459 : vector<16x1xi32>
    %461 = vector.shape_cast %460 : vector<16x1xi1> to vector<16x1xi1>
    %462 = vector.broadcast %461 : vector<16x1xi1> to vector<16x41xi1>
    %463 = vector.shape_cast %458 : vector<1x41xf32> to vector<1x41xf32>
    %464 = vector.broadcast %463 : vector<1x41xf32> to vector<16x41xf32>
    %465 = arith.select %462, %464, %457 : vector<16x41xi1>, vector<16x41xf32>
    %c58 = arith.constant 58 : index
    %c0_60 = arith.constant 0 : index
    %466 = vector.load %arg1[%c58, %c0_60] : memref<64x41xf32, #tpu.memory_space<vmem>>, vector<1x41xf32>
    %c58_i32 = arith.constant 58 : i32
    %467 = vector.broadcast %c58_i32 : i32 to vector<16x1xi32>
    %468 = arith.cmpi eq, %0, %467 : vector<16x1xi32>
    %469 = vector.shape_cast %468 : vector<16x1xi1> to vector<16x1xi1>
    %470 = vector.broadcast %469 : vector<16x1xi1> to vector<16x41xi1>
    %471 = vector.shape_cast %466 : vector<1x41xf32> to vector<1x41xf32>
    %472 = vector.broadcast %471 : vector<1x41xf32> to vector<16x41xf32>
    %473 = arith.select %470, %472, %465 : vector<16x41xi1>, vector<16x41xf32>
    %c59 = arith.constant 59 : index
    %c0_61 = arith.constant 0 : index
    %474 = vector.load %arg1[%c59, %c0_61] : memref<64x41xf32, #tpu.memory_space<vmem>>, vector<1x41xf32>
    %c59_i32 = arith.constant 59 : i32
    %475 = vector.broadcast %c59_i32 : i32 to vector<16x1xi32>
    %476 = arith.cmpi eq, %0, %475 : vector<16x1xi32>
    %477 = vector.shape_cast %476 : vector<16x1xi1> to vector<16x1xi1>
    %478 = vector.broadcast %477 : vector<16x1xi1> to vector<16x41xi1>
    %479 = vector.shape_cast %474 : vector<1x41xf32> to vector<1x41xf32>
    %480 = vector.broadcast %479 : vector<1x41xf32> to vector<16x41xf32>
    %481 = arith.select %478, %480, %473 : vector<16x41xi1>, vector<16x41xf32>
    %c60 = arith.constant 60 : index
    %c0_62 = arith.constant 0 : index
    %482 = vector.load %arg1[%c60, %c0_62] : memref<64x41xf32, #tpu.memory_space<vmem>>, vector<1x41xf32>
    %c60_i32 = arith.constant 60 : i32
    %483 = vector.broadcast %c60_i32 : i32 to vector<16x1xi32>
    %484 = arith.cmpi eq, %0, %483 : vector<16x1xi32>
    %485 = vector.shape_cast %484 : vector<16x1xi1> to vector<16x1xi1>
    %486 = vector.broadcast %485 : vector<16x1xi1> to vector<16x41xi1>
    %487 = vector.shape_cast %482 : vector<1x41xf32> to vector<1x41xf32>
    %488 = vector.broadcast %487 : vector<1x41xf32> to vector<16x41xf32>
    %489 = arith.select %486, %488, %481 : vector<16x41xi1>, vector<16x41xf32>
    %c61 = arith.constant 61 : index
    %c0_63 = arith.constant 0 : index
    %490 = vector.load %arg1[%c61, %c0_63] : memref<64x41xf32, #tpu.memory_space<vmem>>, vector<1x41xf32>
    %c61_i32 = arith.constant 61 : i32
    %491 = vector.broadcast %c61_i32 : i32 to vector<16x1xi32>
    %492 = arith.cmpi eq, %0, %491 : vector<16x1xi32>
    %493 = vector.shape_cast %492 : vector<16x1xi1> to vector<16x1xi1>
    %494 = vector.broadcast %493 : vector<16x1xi1> to vector<16x41xi1>
    %495 = vector.shape_cast %490 : vector<1x41xf32> to vector<1x41xf32>
    %496 = vector.broadcast %495 : vector<1x41xf32> to vector<16x41xf32>
    %497 = arith.select %494, %496, %489 : vector<16x41xi1>, vector<16x41xf32>
    %c62 = arith.constant 62 : index
    %c0_64 = arith.constant 0 : index
    %498 = vector.load %arg1[%c62, %c0_64] : memref<64x41xf32, #tpu.memory_space<vmem>>, vector<1x41xf32>
    %c62_i32 = arith.constant 62 : i32
    %499 = vector.broadcast %c62_i32 : i32 to vector<16x1xi32>
    %500 = arith.cmpi eq, %0, %499 : vector<16x1xi32>
    %501 = vector.shape_cast %500 : vector<16x1xi1> to vector<16x1xi1>
    %502 = vector.broadcast %501 : vector<16x1xi1> to vector<16x41xi1>
    %503 = vector.shape_cast %498 : vector<1x41xf32> to vector<1x41xf32>
    %504 = vector.broadcast %503 : vector<1x41xf32> to vector<16x41xf32>
    %505 = arith.select %502, %504, %497 : vector<16x41xi1>, vector<16x41xf32>
    %c63 = arith.constant 63 : index
    %c0_65 = arith.constant 0 : index
    %506 = vector.load %arg1[%c63, %c0_65] : memref<64x41xf32, #tpu.memory_space<vmem>>, vector<1x41xf32>
    %c63_i32 = arith.constant 63 : i32
    %507 = vector.broadcast %c63_i32 : i32 to vector<16x1xi32>
    %508 = arith.cmpi eq, %0, %507 : vector<16x1xi32>
    %509 = vector.shape_cast %508 : vector<16x1xi1> to vector<16x1xi1>
    %510 = vector.broadcast %509 : vector<16x1xi1> to vector<16x41xi1>
    %511 = vector.shape_cast %506 : vector<1x41xf32> to vector<1x41xf32>
    %512 = vector.broadcast %511 : vector<1x41xf32> to vector<16x41xf32>
    %513 = arith.select %510, %512, %505 : vector<16x41xi1>, vector<16x41xf32>
    %c0_66 = arith.constant 0 : index
    %c0_67 = arith.constant 0 : index
    %514 = vector.load %arg2[%c0_66, %c0_67] : memref<16x41xf32, #tpu.memory_space<vmem>>, vector<16x41xf32>
    tpu.vector_store %arg2[%c0_66, %c0_67], %513 {strides = array<i32>} : memref<16x41xf32, #tpu.memory_space<vmem>>, vector<16x41xf32>,
    return
  }
}

</mosaic_0001>

<llo_original>
// kernel: embedding_forward.1
$region0: #{embedding_forward.1}
  #allocation0 [shape = 'u32[]', space=smem, size = 0x4, offset = 0x4, fixed_abs, tag = 'smem constant byte address 0x4 - core index']
  #allocation1 [shape = 'u32[144,128]{1,0:T(1,128)}', space=vmem, size = 0x12000, scoped, tag = 'internal scratch']
  %s0 = inlined_call_operand.vmem [shape: s32[16,1], index: 0, kind: input, shape index: {}]
  %s1 = inlined_call_operand.vmem [shape: f32[64,41], index: 1, kind: input, shape index: {}]
  %s2 = inlined_call_operand.hbm [shape: f32[16,41], index: 2, kind: output, shape index: {}]
  %s3 = sld [smem:[#allocation0]]
  $region18: #{embedding_forward.1} parent=0
    _
  %s5 = ssub.s32 1, %s3
  %s6 = scalar_select 0, %s5, %s3
  $region1: #{embedding_forward.1} parent=0
    #allocation2 [shape = 'u8[8192]{0}', space=vmem, size = 0x2000, scoped, tag = 'output window, operand 0, single buffered']
    #allocation3 [shape = 's32[1]{0}', space=sflag, size = 0x4, scoped, tag = 'scoped memory for embedding_forward.1']
    %7 = vsyncpa [#allocation3], 0
    // Predicated region
    $region2: #{embedding_forward.1} parent=1 // pred_check
      _
    $region3: #{embedding_forward.1} parent=1 // pred_check_branch
      %9 = sbr.rel (0) target = $region5
    $region4: #{embedding_forward.1} parent=1 // pred_region
      _
    $region5: #{embedding_forward.1} parent=1 // pred_fallthru
      _
    // Predicated region
    $region6: #{embedding_forward.1} parent=1 // pred_check
      _
    $region7: #{embedding_forward.1} parent=1 // pred_check_branch
      %11 = sbr.rel (0) target = $region9
    $region8: #{embedding_forward.1} parent=1 // pred_region
      _
    $region9: #{embedding_forward.1} parent=1 // pred_fallthru
      _
    %v12 = vld [vmem:[%s0] sm:$0xff]
    %v13 = vld [vmem:[%s0 + $0x8] sm:$0xff]
    %v14 = vld [vmem:[%s1] sm:$0x1]
    %vm15 = vcmp.eq.s32.totalorder %v12, 0
    %vm16 = vcmp.eq.s32.totalorder %v13, 0
    %v17 = vsel %vm15, 1, 0
    %v18 = vsel %vm16, 1, 0
    %19 = vset.pattern.permute.xlu0 0
    %20 = vperm.xlu0 %19, %v17
    %v21 = vpop.permute.xlu0 %20
    %22 = vset.pattern.permute.xlu0 0
    %23 = vperm.xlu0 %22, %v18
    %v24 = vpop.permute.xlu0 %23
    %vm25 = vcmp.eq.s32.totalorder %v21, 1
    %vm26 = vcmp.eq.s32.totalorder %v24, 1
    %v27 = vlaneseq
    %v28 = vshrl.u32 %v27, 7
    %v29 = vsub.s32 0, %v28
    %v30 = vrot.slane %v14, %v29
    %v31 = vsel %vm25, %v30, 0.0
    %v32 = vsel %vm26, %v30, 0.0
    %v33 = vld [vmem:[%s1 + $0x1] sm:$0x1]
    %vm34 = vcmp.eq.s32.totalorder %v12, 1
    %vm35 = vcmp.eq.s32.totalorder %v13, 1
    %v36 = vsel %vm34, 1, 0
    %v37 = vsel %vm35, 1, 0
    %38 = vset.pattern.permute.xlu0 0
    %39 = vperm.xlu0 %38, %v36
    %v40 = vpop.permute.xlu0 %39
    %41 = vset.pattern.permute.xlu0 0
    %42 = vperm.xlu0 %41, %v37
    %v43 = vpop.permute.xlu0 %42
    %vm44 = vcmp.eq.s32.totalorder %v40, 1
    %vm45 = vcmp.eq.s32.totalorder %v43, 1
    %v46 = vlaneseq
    %v47 = vshrl.u32 %v46, 7
    %v48 = vsub.s32 0, %v47
    %v49 = vrot.slane %v33, %v48
    %v50 = vsel %vm44, %v49, %v31
    %v51 = vsel %vm45, %v49, %v32
    %v52 = vld [vmem:[%s1 + $0x2] sm:$0x1]
    %vm53 = vcmp.eq.s32.totalorder %v12, 2
    %vm54 = vcmp.eq.s32.totalorder %v13, 2
    %v55 = vsel %vm53, 1, 0
    %v56 = vsel %vm54, 1, 0
    %57 = vset.pattern.permute.xlu0 0
    %58 = vperm.xlu0 %57, %v55
    %v59 = vpop.permute.xlu0 %58
    %60 = vset.pattern.permute.xlu0 0
    %61 = vperm.xlu0 %60, %v56
    %v62 = vpop.permute.xlu0 %61
    %vm63 = vcmp.eq.s32.totalorder %v59, 1
    %vm64 = vcmp.eq.s32.totalorder %v62, 1
    %v65 = vlaneseq
    %v66 = vshrl.u32 %v65, 7
    %v67 = vsub.s32 0, %v66
    %v68 = vrot.slane %v52, %v67
    %v69 = vsel %vm63, %v68, %v50
    %v70 = vsel %vm64, %v68, %v51
    %v71 = vld [vmem:[%s1 + $0x3] sm:$0x1]
    %vm72 = vcmp.eq.s32.totalorder %v12, 3
    %vm73 = vcmp.eq.s32.totalorder %v13, 3
    %v74 = vsel %vm72, 1, 0
    %v75 = vsel %vm73, 1, 0
    %76 = vset.pattern.permute.xlu0 0
    %77 = vperm.xlu0 %76, %v74
    %v78 = vpop.permute.xlu0 %77
    %79 = vset.pattern.permute.xlu0 0
    %80 = vperm.xlu0 %79, %v75
    %v81 = vpop.permute.xlu0 %80
    %vm82 = vcmp.eq.s32.totalorder %v78, 1
    %vm83 = vcmp.eq.s32.totalorder %v81, 1
    %v84 = vlaneseq
    %v85 = vshrl.u32 %v84, 7
    %v86 = vsub.s32 0, %v85
    %v87 = vrot.slane %v71, %v86
    %v88 = vsel %vm82, %v87, %v69
    %v89 = vsel %vm83, %v87, %v70
    %v90 = vld [vmem:[%s1 + $0x4] sm:$0x1]
    %vm91 = vcmp.eq.s32.totalorder %v12, 4
    %vm92 = vcmp.eq.s32.totalorder %v13, 4
    %v93 = vsel %vm91, 1, 0
    %v94 = vsel %vm92, 1, 0
    %95 = vset.pattern.permute.xlu0 0
    %96 = vperm.xlu0 %95, %v93
    %v97 = vpop.permute.xlu0 %96
    %98 = vset.pattern.permute.xlu0 0
    %99 = vperm.xlu0 %98, %v94
    %v100 = vpop.permute.xlu0 %99
    %vm101 = vcmp.eq.s32.totalorder %v97, 1
    %vm102 = vcmp.eq.s32.totalorder %v100, 1
    %v103 = vlaneseq
    %v104 = vshrl.u32 %v103, 7
    %v105 = vsub.s32 0, %v104
    %v106 = vrot.slane %v90, %v105
    %v107 = vsel %vm101, %v106, %v88
    %v108 = vsel %vm102, %v106, %v89
    %v109 = vld [vmem:[%s1 + $0x5] sm:$0x1]
    %vm110 = vcmp.eq.s32.totalorder %v12, 5
    %vm111 = vcmp.eq.s32.totalorder %v13, 5
    %v112 = vsel %vm110, 1, 0
    %v113 = vsel %vm111, 1, 0
    %114 = vset.pattern.permute.xlu0 0
    %115 = vperm.xlu0 %114, %v112
    %v116 = vpop.permute.xlu0 %115
    %117 = vset.pattern.permute.xlu0 0
    %118 = vperm.xlu0 %117, %v113
    %v119 = vpop.permute.xlu0 %118
    %vm120 = vcmp.eq.s32.totalorder %v116, 1
    %vm121 = vcmp.eq.s32.totalorder %v119, 1
    %v122 = vlaneseq
    %v123 = vshrl.u32 %v122, 7
    %v124 = vsub.s32 0, %v123
    %v125 = vrot.slane %v109, %v124
    %v126 = vsel %vm120, %v125, %v107
    %v127 = vsel %vm121, %v125, %v108
    %v128 = vld [vmem:[%s1 + $0x6] sm:$0x1]
    %vm129 = vcmp.eq.s32.totalorder %v12, 6
    %vm130 = vcmp.eq.s32.totalorder %v13, 6
    %v131 = vsel %vm129, 1, 0
    %v132 = vsel %vm130, 1, 0
    %133 = vset.pattern.permute.xlu0 0
    %134 = vperm.xlu0 %133, %v131
    %v135 = vpop.permute.xlu0 %134
    %136 = vset.pattern.permute.xlu0 0
    %137 = vperm.xlu0 %136, %v132
    %v138 = vpop.permute.xlu0 %137
    %vm139 = vcmp.eq.s32.totalorder %v135, 1
    %vm140 = vcmp.eq.s32.totalorder %v138, 1
    %v141 = vlaneseq
    %v142 = vshrl.u32 %v141, 7
    %v143 = vsub.s32 0, %v142
    %v144 = vrot.slane %v128, %v143
    %v145 = vsel %vm139, %v144, %v126
    %v146 = vsel %vm140, %v144, %v127
    %v147 = vld [vmem:[%s1 + $0x7] sm:$0x1]
    %vm148 = vcmp.eq.s32.totalorder %v12, 7
    %vm149 = vcmp.eq.s32.totalorder %v13, 7
    %v150 = vsel %vm148, 1, 0
    %v151 = vsel %vm149, 1, 0
    %152 = vset.pattern.permute.xlu0 0
    %153 = vperm.xlu0 %152, %v150
    %v154 = vpop.permute.xlu0 %153
    %155 = vset.pattern.permute.xlu0 0
    %156 = vperm.xlu0 %155, %v151
    %v157 = vpop.permute.xlu0 %156
    %vm158 = vcmp.eq.s32.totalorder %v154, 1
    %vm159 = vcmp.eq.s32.totalorder %v157, 1
    %v160 = vlaneseq
    %v161 = vshrl.u32 %v160, 7
    %v162 = vsub.s32 0, %v161
    %v163 = vrot.slane %v147, %v162
    %v164 = vsel %vm158, %v163, %v145
    %v165 = vsel %vm159, %v163, %v146
    %v166 = vld [vmem:[%s1 + $0x8] sm:$0x1]
    %vm167 = vcmp.eq.s32.totalorder %v12, 8
    %vm168 = vcmp.eq.s32.totalorder %v13, 8
    %v169 = vsel %vm167, 1, 0
    %v170 = vsel %vm168, 1, 0
    %171 = vset.pattern.permute.xlu0 0
    %172 = vperm.xlu0 %171, %v169
    %v173 = vpop.permute.xlu0 %172
    %174 = vset.pattern.permute.xlu0 0
    %175 = vperm.xlu0 %174, %v170
    %v176 = vpop.permute.xlu0 %175
    %vm177 = vcmp.eq.s32.totalorder %v173, 1
    %vm178 = vcmp.eq.s32.totalorder %v176, 1
    %v179 = vlaneseq
    %v180 = vshrl.u32 %v179, 7
    %v181 = vsub.s32 0, %v180
    %v182 = vrot.slane %v166, %v181
    %v183 = vsel %vm177, %v182, %v164
    %v184 = vsel %vm178, %v182, %v165
    %v185 = vld [vmem:[%s1 + $0x9] sm:$0x1]
    %vm186 = vcmp.eq.s32.totalorder %v12, 9
    %vm187 = vcmp.eq.s32.totalorder %v13, 9
    %v188 = vsel %vm186, 1, 0
    %v189 = vsel %vm187, 1, 0
    %190 = vset.pattern.permute.xlu0 0
    %191 = vperm.xlu0 %190, %v188
    %v192 = vpop.permute.xlu0 %191
    %193 = vset.pattern.permute.xlu0 0
    %194 = vperm.xlu0 %193, %v189
    %v195 = vpop.permute.xlu0 %194
    %vm196 = vcmp.eq.s32.totalorder %v192, 1
    %vm197 = vcmp.eq.s32.totalorder %v195, 1
    %v198 = vlaneseq
    %v199 = vshrl.u32 %v198, 7
    %v200 = vsub.s32 0, %v199
    %v201 = vrot.slane %v185, %v200
    %v202 = vsel %vm196, %v201, %v183
    %v203 = vsel %vm197, %v201, %v184
    %v204 = vld [vmem:[%s1 + $0xa] sm:$0x1]
    %vm205 = vcmp.eq.s32.totalorder %v12, 10
    %vm206 = vcmp.eq.s32.totalorder %v13, 10
    %v207 = vsel %vm205, 1, 0
    %v208 = vsel %vm206, 1, 0
    %209 = vset.pattern.permute.xlu0 0
    %210 = vperm.xlu0 %209, %v207
    %v211 = vpop.permute.xlu0 %210
    %212 = vset.pattern.permute.xlu0 0
    %213 = vperm.xlu0 %212, %v208
    %v214 = vpop.permute.xlu0 %213
    %vm215 = vcmp.eq.s32.totalorder %v211, 1
    %vm216 = vcmp.eq.s32.totalorder %v214, 1
    %v217 = vlaneseq
    %v218 = vshrl.u32 %v217, 7
    %v219 = vsub.s32 0, %v218
    %v220 = vrot.slane %v204, %v219
    %v221 = vsel %vm215, %v220, %v202
    %v222 = vsel %vm216, %v220, %v203
    %v223 = vld [vmem:[%s1 + $0xb] sm:$0x1]
    %vm224 = vcmp.eq.s32.totalorder %v12, 11
    %vm225 = vcmp.eq.s32.totalorder %v13, 11
    %v226 = vsel %vm224, 1, 0
    %v227 = vsel %vm225, 1, 0
    %228 = vset.pattern.permute.xlu0 0
    %229 = vperm.xlu0 %228, %v226
    %v230 = vpop.permute.xlu0 %229
    %231 = vset.pattern.permute.xlu0 0
    %232 = vperm.xlu0 %231, %v227
    %v233 = vpop.permute.xlu0 %232
    %vm234 = vcmp.eq.s32.totalorder %v230, 1
    %vm235 = vcmp.eq.s32.totalorder %v233, 1
    %v236 = vlaneseq
    %v237 = vshrl.u32 %v236, 7
    %v238 = vsub.s32 0, %v237
    %v239 = vrot.slane %v223, %v238
    %v240 = vsel %vm234, %v239, %v221
    %v241 = vsel %vm235, %v239, %v222
    %v242 = vld [vmem:[%s1 + $0xc] sm:$0x1]
    %vm243 = vcmp.eq.s32.totalorder %v12, 12
    %vm244 = vcmp.eq.s32.totalorder %v13, 12
    %v245 = vsel %vm243, 1, 0
    %v246 = vsel %vm244, 1, 0
    %247 = vset.pattern.permute.xlu0 0
    %248 = vperm.xlu0 %247, %v245
    %v249 = vpop.permute.xlu0 %248
    %250 = vset.pattern.permute.xlu0 0
    %251 = vperm.xlu0 %250, %v246
    %v252 = vpop.permute.xlu0 %251
    %vm253 = vcmp.eq.s32.totalorder %v249, 1
    %vm254 = vcmp.eq.s32.totalorder %v252, 1
    %v255 = vlaneseq
    %v256 = vshrl.u32 %v255, 7
    %v257 = vsub.s32 0, %v256
    %v258 = vrot.slane %v242, %v257
    %v259 = vsel %vm253, %v258, %v240
    %v260 = vsel %vm254, %v258, %v241
    %v261 = vld [vmem:[%s1 + $0xd] sm:$0x1]
    %vm262 = vcmp.eq.s32.totalorder %v12, 13
    %vm263 = vcmp.eq.s32.totalorder %v13, 13
    %v264 = vsel %vm262, 1, 0
    %v265 = vsel %vm263, 1, 0
    %266 = vset.pattern.permute.xlu0 0
    %267 = vperm.xlu0 %266, %v264
    %v268 = vpop.permute.xlu0 %267
    %269 = vset.pattern.permute.xlu0 0
    %270 = vperm.xlu0 %269, %v265
    %v271 = vpop.permute.xlu0 %270
    %vm272 = vcmp.eq.s32.totalorder %v268, 1
    %vm273 = vcmp.eq.s32.totalorder %v271, 1
    %v274 = vlaneseq
    %v275 = vshrl.u32 %v274, 7
    %v276 = vsub.s32 0, %v275
    %v277 = vrot.slane %v261, %v276
    %v278 = vsel %vm272, %v277, %v259
    %v279 = vsel %vm273, %v277, %v260
    %v280 = vld [vmem:[%s1 + $0xe] sm:$0x1]
    %vm281 = vcmp.eq.s32.totalorder %v12, 14
    %vm282 = vcmp.eq.s32.totalorder %v13, 14
    %v283 = vsel %vm281, 1, 0
    %v284 = vsel %vm282, 1, 0
    %285 = vset.pattern.permute.xlu0 0
    %286 = vperm.xlu0 %285, %v283
    %v287 = vpop.permute.xlu0 %286
    %288 = vset.pattern.permute.xlu0 0
    %289 = vperm.xlu0 %288, %v284
    %v290 = vpop.permute.xlu0 %289
    %vm291 = vcmp.eq.s32.totalorder %v287, 1
    %vm292 = vcmp.eq.s32.totalorder %v290, 1
    %v293 = vlaneseq
    %v294 = vshrl.u32 %v293, 7
    %v295 = vsub.s32 0, %v294
    %v296 = vrot.slane %v280, %v295
    %v297 = vsel %vm291, %v296, %v278
    %v298 = vsel %vm292, %v296, %v279
    %v299 = vld [vmem:[%s1 + $0xf] sm:$0x1]
    %vm300 = vcmp.eq.s32.totalorder %v12, 15
    %vm301 = vcmp.eq.s32.totalorder %v13, 15
    %v302 = vsel %vm300, 1, 0
    %v303 = vsel %vm301, 1, 0
    %304 = vset.pattern.permute.xlu0 0
    %305 = vperm.xlu0 %304, %v302
    %v306 = vpop.permute.xlu0 %305
    %307 = vset.pattern.permute.xlu0 0
    %308 = vperm.xlu0 %307, %v303
    %v309 = vpop.permute.xlu0 %308
    %vm310 = vcmp.eq.s32.totalorder %v306, 1
    %vm311 = vcmp.eq.s32.totalorder %v309, 1
    %v312 = vlaneseq
    %v313 = vshrl.u32 %v312, 7
    %v314 = vsub.s32 0, %v313
    %v315 = vrot.slane %v299, %v314
    %v316 = vsel %vm310, %v315, %v297
    %v317 = vsel %vm311, %v315, %v298
    %v318 = vld [vmem:[%s1 + $0x10] sm:$0x1]
    %vm319 = vcmp.eq.s32.totalorder %v12, 16
    %vm320 = vcmp.eq.s32.totalorder %v13, 16
    %v321 = vsel %vm319, 1, 0
    %v322 = vsel %vm320, 1, 0
    %323 = vset.pattern.permute.xlu0 0
    %324 = vperm.xlu0 %323, %v321
    %v325 = vpop.permute.xlu0 %324
    %326 = vset.pattern.permute.xlu0 0
    %327 = vperm.xlu0 %326, %v322
    %v328 = vpop.permute.xlu0 %327
    %vm329 = vcmp.eq.s32.totalorder %v325, 1
    %vm330 = vcmp.eq.s32.totalorder %v328, 1
    %v331 = vlaneseq
    %v332 = vshrl.u32 %v331, 7
    %v333 = vsub.s32 0, %v332
    %v334 = vrot.slane %v318, %v333
    %v335 = vsel %vm329, %v334, %v316
    %v336 = vsel %vm330, %v334, %v317
    %v337 = vld [vmem:[%s1 + $0x11] sm:$0x1]
    %vm338 = vcmp.eq.s32.totalorder %v12, 17
    %vm339 = vcmp.eq.s32.totalorder %v13, 17
    %v340 = vsel %vm338, 1, 0
    %v341 = vsel %vm339, 1, 0
    %342 = vset.pattern.permute.xlu0 0
    %343 = vperm.xlu0 %342, %v340
    %v344 = vpop.permute.xlu0 %343
    %345 = vset.pattern.permute.xlu0 0
    %346 = vperm.xlu0 %345, %v341
    %v347 = vpop.permute.xlu0 %346
    %vm348 = vcmp.eq.s32.totalorder %v344, 1
    %vm349 = vcmp.eq.s32.totalorder %v347, 1
    %v350 = vlaneseq
    %v351 = vshrl.u32 %v350, 7
    %v352 = vsub.s32 0, %v351
    %v353 = vrot.slane %v337, %v352
    %v354 = vsel %vm348, %v353, %v335
    %v355 = vsel %vm349, %v353, %v336
    %v356 = vld [vmem:[%s1 + $0x12] sm:$0x1]
    %vm357 = vcmp.eq.s32.totalorder %v12, 18
    %vm358 = vcmp.eq.s32.totalorder %v13, 18
    %v359 = vsel %vm357, 1, 0
    %v360 = vsel %vm358, 1, 0
    %361 = vset.pattern.permute.xlu0 0
    %362 = vperm.xlu0 %361, %v359
    %v363 = vpop.permute.xlu0 %362
    %364 = vset.pattern.permute.xlu0 0
    %365 = vperm.xlu0 %364, %v360
    %v366 = vpop.permute.xlu0 %365
    %vm367 = vcmp.eq.s32.totalorder %v363, 1
    %vm368 = vcmp.eq.s32.totalorder %v366, 1
    %v369 = vlaneseq
    %v370 = vshrl.u32 %v369, 7
    %v371 = vsub.s32 0, %v370
    %v372 = vrot.slane %v356, %v371
    %v373 = vsel %vm367, %v372, %v354
    %v374 = vsel %vm368, %v372, %v355
    %v375 = vld [vmem:[%s1 + $0x13] sm:$0x1]
    %vm376 = vcmp.eq.s32.totalorder %v12, 19
    %vm377 = vcmp.eq.s32.totalorder %v13, 19
    %v378 = vsel %vm376, 1, 0
    %v379 = vsel %vm377, 1, 0
    %380 = vset.pattern.permute.xlu0 0
    %381 = vperm.xlu0 %380, %v378
    %v382 = vpop.permute.xlu0 %381
    %383 = vset.pattern.permute.xlu0 0
    %384 = vperm.xlu0 %383, %v379
    %v385 = vpop.permute.xlu0 %384
    %vm386 = vcmp.eq.s32.totalorder %v382, 1
    %vm387 = vcmp.eq.s32.totalorder %v385, 1
    %v388 = vlaneseq
    %v389 = vshrl.u32 %v388, 7
    %v390 = vsub.s32 0, %v389
    %v391 = vrot.slane %v375, %v390
    %v392 = vsel %vm386, %v391, %v373
    %v393 = vsel %vm387, %v391, %v374
    %v394 = vld [vmem:[%s1 + $0x14] sm:$0x1]
    %vm395 = vcmp.eq.s32.totalorder %v12, 20
    %vm396 = vcmp.eq.s32.totalorder %v13, 20
    %v397 = vsel %vm395, 1, 0
    %v398 = vsel %vm396, 1, 0
    %399 = vset.pattern.permute.xlu0 0
    %400 = vperm.xlu0 %399, %v397
    %v401 = vpop.permute.xlu0 %400
    %402 = vset.pattern.permute.xlu0 0
    %403 = vperm.xlu0 %402, %v398
    %v404 = vpop.permute.xlu0 %403
    %vm405 = vcmp.eq.s32.totalorder %v401, 1
    %vm406 = vcmp.eq.s32.totalorder %v404, 1
    %v407 = vlaneseq
    %v408 = vshrl.u32 %v407, 7
    %v409 = vsub.s32 0, %v408
    %v410 = vrot.slane %v394, %v409
    %v411 = vsel %vm405, %v410, %v392
    %v412 = vsel %vm406, %v410, %v393
    %v413 = vld [vmem:[%s1 + $0x15] sm:$0x1]
    %vm414 = vcmp.eq.s32.totalorder %v12, 21
    %vm415 = vcmp.eq.s32.totalorder %v13, 21
    %v416 = vsel %vm414, 1, 0
    %v417 = vsel %vm415, 1, 0
    %418 = vset.pattern.permute.xlu0 0
    %419 = vperm.xlu0 %418, %v416
    %v420 = vpop.permute.xlu0 %419
    %421 = vset.pattern.permute.xlu0 0
    %422 = vperm.xlu0 %421, %v417
    %v423 = vpop.permute.xlu0 %422
    %vm424 = vcmp.eq.s32.totalorder %v420, 1
    %vm425 = vcmp.eq.s32.totalorder %v423, 1
    %v426 = vlaneseq
    %v427 = vshrl.u32 %v426, 7
    %v428 = vsub.s32 0, %v427
    %v429 = vrot.slane %v413, %v428
    %v430 = vsel %vm424, %v429, %v411
    %v431 = vsel %vm425, %v429, %v412
    %v432 = vld [vmem:[%s1 + $0x16] sm:$0x1]
    %vm433 = vcmp.eq.s32.totalorder %v12, 22
    %vm434 = vcmp.eq.s32.totalorder %v13, 22
    %v435 = vsel %vm433, 1, 0
    %v436 = vsel %vm434, 1, 0
    %437 = vset.pattern.permute.xlu0 0
    %438 = vperm.xlu0 %437, %v435
    %v439 = vpop.permute.xlu0 %438
    %440 = vset.pattern.permute.xlu0 0
    %441 = vperm.xlu0 %440, %v436
    %v442 = vpop.permute.xlu0 %441
    %vm443 = vcmp.eq.s32.totalorder %v439, 1
    %vm444 = vcmp.eq.s32.totalorder %v442, 1
    %v445 = vlaneseq
    %v446 = vshrl.u32 %v445, 7
    %v447 = vsub.s32 0, %v446
    %v448 = vrot.slane %v432, %v447
    %v449 = vsel %vm443, %v448, %v430
    %v450 = vsel %vm444, %v448, %v431
    %v451 = vld [vmem:[%s1 + $0x17] sm:$0x1]
    %vm452 = vcmp.eq.s32.totalorder %v12, 23
    %vm453 = vcmp.eq.s32.totalorder %v13, 23
    %v454 = vsel %vm452, 1, 0
    %v455 = vsel %vm453, 1, 0
    %456 = vset.pattern.permute.xlu0 0
    %457 = vperm.xlu0 %456, %v454
    %v458 = vpop.permute.xlu0 %457
    %459 = vset.pattern.permute.xlu0 0
    %460 = vperm.xlu0 %459, %v455
    %v461 = vpop.permute.xlu0 %460
    %vm462 = vcmp.eq.s32.totalorder %v458, 1
    %vm463 = vcmp.eq.s32.totalorder %v461, 1
    %v464 = vlaneseq
    %v465 = vshrl.u32 %v464, 7
    %v466 = vsub.s32 0, %v465
    %v467 = vrot.slane %v451, %v466
    %v468 = vsel %vm462, %v467, %v449
    %v469 = vsel %vm463, %v467, %v450
    %v470 = vld [vmem:[%s1 + $0x18] sm:$0x1]
    %vm471 = vcmp.eq.s32.totalorder %v12, 24
    %vm472 = vcmp.eq.s32.totalorder %v13, 24
    %v473 = vsel %vm471, 1, 0
    %v474 = vsel %vm472, 1, 0
    %475 = vset.pattern.permute.xlu0 0
    %476 = vperm.xlu0 %475, %v473
    %v477 = vpop.permute.xlu0 %476
    %478 = vset.pattern.permute.xlu0 0
    %479 = vperm.xlu0 %478, %v474
    %v480 = vpop.permute.xlu0 %479
    %vm481 = vcmp.eq.s32.totalorder %v477, 1
    %vm482 = vcmp.eq.s32.totalorder %v480, 1
    %v483 = vlaneseq
    %v484 = vshrl.u32 %v483, 7
    %v485 = vsub.s32 0, %v484
    %v486 = vrot.slane %v470, %v485
    %v487 = vsel %vm481, %v486, %v468
    %v488 = vsel %vm482, %v486, %v469
    %v489 = vld [vmem:[%s1 + $0x19] sm:$0x1]
    %vm490 = vcmp.eq.s32.totalorder %v12, 25
    %vm491 = vcmp.eq.s32.totalorder %v13, 25
    %v492 = vsel %vm490, 1, 0
    %v493 = vsel %vm491, 1, 0
    %494 = vset.pattern.permute.xlu0 0
    %495 = vperm.xlu0 %494, %v492
    %v496 = vpop.permute.xlu0 %495
    %497 = vset.pattern.permute.xlu0 0
    %498 = vperm.xlu0 %497, %v493
    %v499 = vpop.permute.xlu0 %498
    %vm500 = vcmp.eq.s32.totalorder %v496, 1
    %vm501 = vcmp.eq.s32.totalorder %v499, 1
    %v502 = vlaneseq
    %v503 = vshrl.u32 %v502, 7
    %v504 = vsub.s32 0, %v503
    %v505 = vrot.slane %v489, %v504
    %v506 = vsel %vm500, %v505, %v487
    %v507 = vsel %vm501, %v505, %v488
    %v508 = vld [vmem:[%s1 + $0x1a] sm:$0x1]
    %vm509 = vcmp.eq.s32.totalorder %v12, 26
    %vm510 = vcmp.eq.s32.totalorder %v13, 26
    %v511 = vsel %vm509, 1, 0
    %v512 = vsel %vm510, 1, 0
    %513 = vset.pattern.permute.xlu0 0
    %514 = vperm.xlu0 %513, %v511
    %v515 = vpop.permute.xlu0 %514
    %516 = vset.pattern.permute.xlu0 0
    %517 = vperm.xlu0 %516, %v512
    %v518 = vpop.permute.xlu0 %517
    %vm519 = vcmp.eq.s32.totalorder %v515, 1
    %vm520 = vcmp.eq.s32.totalorder %v518, 1
    %v521 = vlaneseq
    %v522 = vshrl.u32 %v521, 7
    %v523 = vsub.s32 0, %v522
    %v524 = vrot.slane %v508, %v523
    %v525 = vsel %vm519, %v524, %v506
    %v526 = vsel %vm520, %v524, %v507
    %v527 = vld [vmem:[%s1 + $0x1b] sm:$0x1]
    %vm528 = vcmp.eq.s32.totalorder %v12, 27
    %vm529 = vcmp.eq.s32.totalorder %v13, 27
    %v530 = vsel %vm528, 1, 0
    %v531 = vsel %vm529, 1, 0
    %532 = vset.pattern.permute.xlu0 0
    %533 = vperm.xlu0 %532, %v530
    %v534 = vpop.permute.xlu0 %533
    %535 = vset.pattern.permute.xlu0 0
    %536 = vperm.xlu0 %535, %v531
    %v537 = vpop.permute.xlu0 %536
    %vm538 = vcmp.eq.s32.totalorder %v534, 1
    %vm539 = vcmp.eq.s32.totalorder %v537, 1
    %v540 = vlaneseq
    %v541 = vshrl.u32 %v540, 7
    %v542 = vsub.s32 0, %v541
    %v543 = vrot.slane %v527, %v542
    %v544 = vsel %vm538, %v543, %v525
    %v545 = vsel %vm539, %v543, %v526
    %v546 = vld [vmem:[%s1 + $0x1c] sm:$0x1]
    %vm547 = vcmp.eq.s32.totalorder %v12, 28
    %vm548 = vcmp.eq.s32.totalorder %v13, 28
    %v549 = vsel %vm547, 1, 0
    %v550 = vsel %vm548, 1, 0
    %551 = vset.pattern.permute.xlu0 0
    %552 = vperm.xlu0 %551, %v549
    %v553 = vpop.permute.xlu0 %552
    %554 = vset.pattern.permute.xlu0 0
    %555 = vperm.xlu0 %554, %v550
    %v556 = vpop.permute.xlu0 %555
    %vm557 = vcmp.eq.s32.totalorder %v553, 1
    %vm558 = vcmp.eq.s32.totalorder %v556, 1
    %v559 = vlaneseq
    %v560 = vshrl.u32 %v559, 7
    %v561 = vsub.s32 0, %v560
    %v562 = vrot.slane %v546, %v561
    %v563 = vsel %vm557, %v562, %v544
    %v564 = vsel %vm558, %v562, %v545
    %v565 = vld [vmem:[%s1 + $0x1d] sm:$0x1]
    %vm566 = vcmp.eq.s32.totalorder %v12, 29
    %vm567 = vcmp.eq.s32.totalorder %v13, 29
    %v568 = vsel %vm566, 1, 0
    %v569 = vsel %vm567, 1, 0
    %570 = vset.pattern.permute.xlu0 0
    %571 = vperm.xlu0 %570, %v568
    %v572 = vpop.permute.xlu0 %571
    %573 = vset.pattern.permute.xlu0 0
    %574 = vperm.xlu0 %573, %v569
    %v575 = vpop.permute.xlu0 %574
    %vm576 = vcmp.eq.s32.totalorder %v572, 1
    %vm577 = vcmp.eq.s32.totalorder %v575, 1
    %v578 = vlaneseq
    %v579 = vshrl.u32 %v578, 7
    %v580 = vsub.s32 0, %v579
    %v581 = vrot.slane %v565, %v580
    %v582 = vsel %vm576, %v581, %v563
    %v583 = vsel %vm577, %v581, %v564
    %v584 = vld [vmem:[%s1 + $0x1e] sm:$0x1]
    %vm585 = vcmp.eq.s32.totalorder %v12, 30
    %vm586 = vcmp.eq.s32.totalorder %v13, 30
    %v587 = vsel %vm585, 1, 0
    %v588 = vsel %vm586, 1, 0
    %589 = vset.pattern.permute.xlu0 0
    %590 = vperm.xlu0 %589, %v587
    %v591 = vpop.permute.xlu0 %590
    %592 = vset.pattern.permute.xlu0 0
    %593 = vperm.xlu0 %592, %v588
    %v594 = vpop.permute.xlu0 %593
    %vm595 = vcmp.eq.s32.totalorder %v591, 1
    %vm596 = vcmp.eq.s32.totalorder %v594, 1
    %v597 = vlaneseq
    %v598 = vshrl.u32 %v597, 7
    %v599 = vsub.s32 0, %v598
    %v600 = vrot.slane %v584, %v599
    %v601 = vsel %vm595, %v600, %v582
    %v602 = vsel %vm596, %v600, %v583
    %v603 = vld [vmem:[%s1 + $0x1f] sm:$0x1]
    %vm604 = vcmp.eq.s32.totalorder %v12, 31
    %vm605 = vcmp.eq.s32.totalorder %v13, 31
    %v606 = vsel %vm604, 1, 0
    %v607 = vsel %vm605, 1, 0
    %608 = vset.pattern.permute.xlu0 0
    %609 = vperm.xlu0 %608, %v606
    %v610 = vpop.permute.xlu0 %609
    %611 = vset.pattern.permute.xlu0 0
    %612 = vperm.xlu0 %611, %v607
    %v613 = vpop.permute.xlu0 %612
    %vm614 = vcmp.eq.s32.totalorder %v610, 1
    %vm615 = vcmp.eq.s32.totalorder %v613, 1
    %v616 = vlaneseq
    %v617 = vshrl.u32 %v616, 7
    %v618 = vsub.s32 0, %v617
    %v619 = vrot.slane %v603, %v618
    %v620 = vsel %vm614, %v619, %v601
    %v621 = vsel %vm615, %v619, %v602
    %v622 = vld [vmem:[%s1 + $0x20] sm:$0x1]
    %vm623 = vcmp.eq.s32.totalorder %v12, 32
    %vm624 = vcmp.eq.s32.totalorder %v13, 32
    %v625 = vsel %vm623, 1, 0
    %v626 = vsel %vm624, 1, 0
    %627 = vset.pattern.permute.xlu0 0
    %628 = vperm.xlu0 %627, %v625
    %v629 = vpop.permute.xlu0 %628
    %630 = vset.pattern.permute.xlu0 0
    %631 = vperm.xlu0 %630, %v626
    %v632 = vpop.permute.xlu0 %631
    %vm633 = vcmp.eq.s32.totalorder %v629, 1
    %vm634 = vcmp.eq.s32.totalorder %v632, 1
    %v635 = vlaneseq
    %v636 = vshrl.u32 %v635, 7
    %v637 = vsub.s32 0, %v636
    %v638 = vrot.slane %v622, %v637
    %v639 = vsel %vm633, %v638, %v620
    %v640 = vsel %vm634, %v638, %v621
    %v641 = vld [vmem:[%s1 + $0x21] sm:$0x1]
    %vm642 = vcmp.eq.s32.totalorder %v12, 33
    %vm643 = vcmp.eq.s32.totalorder %v13, 33
    %v644 = vsel %vm642, 1, 0
    %v645 = vsel %vm643, 1, 0
    %646 = vset.pattern.permute.xlu0 0
    %647 = vperm.xlu0 %646, %v644
    %v648 = vpop.permute.xlu0 %647
    %649 = vset.pattern.permute.xlu0 0
    %650 = vperm.xlu0 %649, %v645
    %v651 = vpop.permute.xlu0 %650
    %vm652 = vcmp.eq.s32.totalorder %v648, 1
    %vm653 = vcmp.eq.s32.totalorder %v651, 1
    %v654 = vlaneseq
    %v655 = vshrl.u32 %v654, 7
    %v656 = vsub.s32 0, %v655
    %v657 = vrot.slane %v641, %v656
    %v658 = vsel %vm652, %v657, %v639
    %v659 = vsel %vm653, %v657, %v640
    %v660 = vld [vmem:[%s1 + $0x22] sm:$0x1]
    %vm661 = vcmp.eq.s32.totalorder %v12, 34
    %vm662 = vcmp.eq.s32.totalorder %v13, 34
    %v663 = vsel %vm661, 1, 0
    %v664 = vsel %vm662, 1, 0
    %665 = vset.pattern.permute.xlu0 0
    %666 = vperm.xlu0 %665, %v663
    %v667 = vpop.permute.xlu0 %666
    %668 = vset.pattern.permute.xlu0 0
    %669 = vperm.xlu0 %668, %v664
    %v670 = vpop.permute.xlu0 %669
    %vm671 = vcmp.eq.s32.totalorder %v667, 1
    %vm672 = vcmp.eq.s32.totalorder %v670, 1
    %v673 = vlaneseq
    %v674 = vshrl.u32 %v673, 7
    %v675 = vsub.s32 0, %v674
    %v676 = vrot.slane %v660, %v675
    %v677 = vsel %vm671, %v676, %v658
    %v678 = vsel %vm672, %v676, %v659
    %v679 = vld [vmem:[%s1 + $0x23] sm:$0x1]
    %vm680 = vcmp.eq.s32.totalorder %v12, 35
    %vm681 = vcmp.eq.s32.totalorder %v13, 35
    %v682 = vsel %vm680, 1, 0
    %v683 = vsel %vm681, 1, 0
    %684 = vset.pattern.permute.xlu0 0
    %685 = vperm.xlu0 %684, %v682
    %v686 = vpop.permute.xlu0 %685
    %687 = vset.pattern.permute.xlu0 0
    %688 = vperm.xlu0 %687, %v683
    %v689 = vpop.permute.xlu0 %688
    %vm690 = vcmp.eq.s32.totalorder %v686, 1
    %vm691 = vcmp.eq.s32.totalorder %v689, 1
    %v692 = vlaneseq
    %v693 = vshrl.u32 %v692, 7
    %v694 = vsub.s32 0, %v693
    %v695 = vrot.slane %v679, %v694
    %v696 = vsel %vm690, %v695, %v677
    %v697 = vsel %vm691, %v695, %v678
    %v698 = vld [vmem:[%s1 + $0x24] sm:$0x1]
    %vm699 = vcmp.eq.s32.totalorder %v12, 36
    %vm700 = vcmp.eq.s32.totalorder %v13, 36
    %v701 = vsel %vm699, 1, 0
    %v702 = vsel %vm700, 1, 0
    %703 = vset.pattern.permute.xlu0 0
    %704 = vperm.xlu0 %703, %v701
    %v705 = vpop.permute.xlu0 %704
    %706 = vset.pattern.permute.xlu0 0
    %707 = vperm.xlu0 %706, %v702
    %v708 = vpop.permute.xlu0 %707
    %vm709 = vcmp.eq.s32.totalorder %v705, 1
    %vm710 = vcmp.eq.s32.totalorder %v708, 1
    %v711 = vlaneseq
    %v712 = vshrl.u32 %v711, 7
    %v713 = vsub.s32 0, %v712
    %v714 = vrot.slane %v698, %v713
    %v715 = vsel %vm709, %v714, %v696
    %v716 = vsel %vm710, %v714, %v697
    %v717 = vld [vmem:[%s1 + $0x25] sm:$0x1]
    %vm718 = vcmp.eq.s32.totalorder %v12, 37
    %vm719 = vcmp.eq.s32.totalorder %v13, 37
    %v720 = vsel %vm718, 1, 0
    %v721 = vsel %vm719, 1, 0
    %722 = vset.pattern.permute.xlu0 0
    %723 = vperm.xlu0 %722, %v720
    %v724 = vpop.permute.xlu0 %723
    %725 = vset.pattern.permute.xlu0 0
    %726 = vperm.xlu0 %725, %v721
    %v727 = vpop.permute.xlu0 %726
    %vm728 = vcmp.eq.s32.totalorder %v724, 1
    %vm729 = vcmp.eq.s32.totalorder %v727, 1
    %v730 = vlaneseq
    %v731 = vshrl.u32 %v730, 7
    %v732 = vsub.s32 0, %v731
    %v733 = vrot.slane %v717, %v732
    %v734 = vsel %vm728, %v733, %v715
    %v735 = vsel %vm729, %v733, %v716
    %v736 = vld [vmem:[%s1 + $0x26] sm:$0x1]
    %vm737 = vcmp.eq.s32.totalorder %v12, 38
    %vm738 = vcmp.eq.s32.totalorder %v13, 38
    %v739 = vsel %vm737, 1, 0
    %v740 = vsel %vm738, 1, 0
    %741 = vset.pattern.permute.xlu0 0
    %742 = vperm.xlu0 %741, %v739
    %v743 = vpop.permute.xlu0 %742
    %744 = vset.pattern.permute.xlu0 0
    %745 = vperm.xlu0 %744, %v740
    %v746 = vpop.permute.xlu0 %745
    %vm747 = vcmp.eq.s32.totalorder %v743, 1
    %vm748 = vcmp.eq.s32.totalorder %v746, 1
    %v749 = vlaneseq
    %v750 = vshrl.u32 %v749, 7
    %v751 = vsub.s32 0, %v750
    %v752 = vrot.slane %v736, %v751
    %v753 = vsel %vm747, %v752, %v734
    %v754 = vsel %vm748, %v752, %v735
    %v755 = vld [vmem:[%s1 + $0x27] sm:$0x1]
    %vm756 = vcmp.eq.s32.totalorder %v12, 39
    %vm757 = vcmp.eq.s32.totalorder %v13, 39
    %v758 = vsel %vm756, 1, 0
    %v759 = vsel %vm757, 1, 0
    %760 = vset.pattern.permute.xlu0 0
    %761 = vperm.xlu0 %760, %v758
    %v762 = vpop.permute.xlu0 %761
    %763 = vset.pattern.permute.xlu0 0
    %764 = vperm.xlu0 %763, %v759
    %v765 = vpop.permute.xlu0 %764
    %vm766 = vcmp.eq.s32.totalorder %v762, 1
    %vm767 = vcmp.eq.s32.totalorder %v765, 1
    %v768 = vlaneseq
    %v769 = vshrl.u32 %v768, 7
    %v770 = vsub.s32 0, %v769
    %v771 = vrot.slane %v755, %v770
    %v772 = vsel %vm766, %v771, %v753
    %v773 = vsel %vm767, %v771, %v754
    %v774 = vld [vmem:[%s1 + $0x28] sm:$0x1]
    %vm775 = vcmp.eq.s32.totalorder %v12, 40
    %vm776 = vcmp.eq.s32.totalorder %v13, 40
    %v777 = vsel %vm775, 1, 0
    %v778 = vsel %vm776, 1, 0
    %779 = vset.pattern.permute.xlu0 0
    %780 = vperm.xlu0 %779, %v777
    %v781 = vpop.permute.xlu0 %780
    %782 = vset.pattern.permute.xlu0 0
    %783 = vperm.xlu0 %782, %v778
    %v784 = vpop.permute.xlu0 %783
    %vm785 = vcmp.eq.s32.totalorder %v781, 1
    %vm786 = vcmp.eq.s32.totalorder %v784, 1
    %v787 = vlaneseq
    %v788 = vshrl.u32 %v787, 7
    %v789 = vsub.s32 0, %v788
    %v790 = vrot.slane %v774, %v789
    %v791 = vsel %vm785, %v790, %v772
    %v792 = vsel %vm786, %v790, %v773
    %v793 = vld [vmem:[%s1 + $0x29] sm:$0x1]
    %vm794 = vcmp.eq.s32.totalorder %v12, 41
    %vm795 = vcmp.eq.s32.totalorder %v13, 41
    %v796 = vsel %vm794, 1, 0
    %v797 = vsel %vm795, 1, 0
    %798 = vset.pattern.permute.xlu0 0
    %799 = vperm.xlu0 %798, %v796
    %v800 = vpop.permute.xlu0 %799
    %801 = vset.pattern.permute.xlu0 0
    %802 = vperm.xlu0 %801, %v797
    %v803 = vpop.permute.xlu0 %802
    %vm804 = vcmp.eq.s32.totalorder %v800, 1
    %vm805 = vcmp.eq.s32.totalorder %v803, 1
    %v806 = vlaneseq
    %v807 = vshrl.u32 %v806, 7
    %v808 = vsub.s32 0, %v807
    %v809 = vrot.slane %v793, %v808
    %v810 = vsel %vm804, %v809, %v791
    %v811 = vsel %vm805, %v809, %v792
    %v812 = vld [vmem:[%s1 + $0x2a] sm:$0x1]
    %vm813 = vcmp.eq.s32.totalorder %v12, 42
    %vm814 = vcmp.eq.s32.totalorder %v13, 42
    %v815 = vsel %vm813, 1, 0
    %v816 = vsel %vm814, 1, 0
    %817 = vset.pattern.permute.xlu0 0
    %818 = vperm.xlu0 %817, %v815
    %v819 = vpop.permute.xlu0 %818
    %820 = vset.pattern.permute.xlu0 0
    %821 = vperm.xlu0 %820, %v816
    %v822 = vpop.permute.xlu0 %821
    %vm823 = vcmp.eq.s32.totalorder %v819, 1
    %vm824 = vcmp.eq.s32.totalorder %v822, 1
    %v825 = vlaneseq
    %v826 = vshrl.u32 %v825, 7
    %v827 = vsub.s32 0, %v826
    %v828 = vrot.slane %v812, %v827
    %v829 = vsel %vm823, %v828, %v810
    %v830 = vsel %vm824, %v828, %v811
    %v831 = vld [vmem:[%s1 + $0x2b] sm:$0x1]
    %vm832 = vcmp.eq.s32.totalorder %v12, 43
    %vm833 = vcmp.eq.s32.totalorder %v13, 43
    %v834 = vsel %vm832, 1, 0
    %v835 = vsel %vm833, 1, 0
    %836 = vset.pattern.permute.xlu0 0
    %837 = vperm.xlu0 %836, %v834
    %v838 = vpop.permute.xlu0 %837
    %839 = vset.pattern.permute.xlu0 0
    %840 = vperm.xlu0 %839, %v835
    %v841 = vpop.permute.xlu0 %840
    %vm842 = vcmp.eq.s32.totalorder %v838, 1
    %vm843 = vcmp.eq.s32.totalorder %v841, 1
    %v844 = vlaneseq
    %v845 = vshrl.u32 %v844, 7
    %v846 = vsub.s32 0, %v845
    %v847 = vrot.slane %v831, %v846
    %v848 = vsel %vm842, %v847, %v829
    %v849 = vsel %vm843, %v847, %v830
    %v850 = vld [vmem:[%s1 + $0x2c] sm:$0x1]
    %vm851 = vcmp.eq.s32.totalorder %v12, 44
    %vm852 = vcmp.eq.s32.totalorder %v13, 44
    %v853 = vsel %vm851, 1, 0
    %v854 = vsel %vm852, 1, 0
    %855 = vset.pattern.permute.xlu0 0
    %856 = vperm.xlu0 %855, %v853
    %v857 = vpop.permute.xlu0 %856
    %858 = vset.pattern.permute.xlu0 0
    %859 = vperm.xlu0 %858, %v854
    %v860 = vpop.permute.xlu0 %859
    %vm861 = vcmp.eq.s32.totalorder %v857, 1
    %vm862 = vcmp.eq.s32.totalorder %v860, 1
    %v863 = vlaneseq
    %v864 = vshrl.u32 %v863, 7
    %v865 = vsub.s32 0, %v864
    %v866 = vrot.slane %v850, %v865
    %v867 = vsel %vm861, %v866, %v848
    %v868 = vsel %vm862, %v866, %v849
    %v869 = vld [vmem:[%s1 + $0x2d] sm:$0x1]
    %vm870 = vcmp.eq.s32.totalorder %v12, 45
    %vm871 = vcmp.eq.s32.totalorder %v13, 45
    %v872 = vsel %vm870, 1, 0
    %v873 = vsel %vm871, 1, 0
    %874 = vset.pattern.permute.xlu0 0
    %875 = vperm.xlu0 %874, %v872
    %v876 = vpop.permute.xlu0 %875
    %877 = vset.pattern.permute.xlu0 0
    %878 = vperm.xlu0 %877, %v873
    %v879 = vpop.permute.xlu0 %878
    %vm880 = vcmp.eq.s32.totalorder %v876, 1
    %vm881 = vcmp.eq.s32.totalorder %v879, 1
    %v882 = vlaneseq
    %v883 = vshrl.u32 %v882, 7
    %v884 = vsub.s32 0, %v883
    %v885 = vrot.slane %v869, %v884
    %v886 = vsel %vm880, %v885, %v867
    %v887 = vsel %vm881, %v885, %v868
    %v888 = vld [vmem:[%s1 + $0x2e] sm:$0x1]
    %vm889 = vcmp.eq.s32.totalorder %v12, 46
    %vm890 = vcmp.eq.s32.totalorder %v13, 46
    %v891 = vsel %vm889, 1, 0
    %v892 = vsel %vm890, 1, 0
    %893 = vset.pattern.permute.xlu0 0
    %894 = vperm.xlu0 %893, %v891
    %v895 = vpop.permute.xlu0 %894
    %896 = vset.pattern.permute.xlu0 0
    %897 = vperm.xlu0 %896, %v892
    %v898 = vpop.permute.xlu0 %897
    %vm899 = vcmp.eq.s32.totalorder %v895, 1
    %vm900 = vcmp.eq.s32.totalorder %v898, 1
    %v901 = vlaneseq
    %v902 = vshrl.u32 %v901, 7
    %v903 = vsub.s32 0, %v902
    %v904 = vrot.slane %v888, %v903
    %v905 = vsel %vm899, %v904, %v886
    %v906 = vsel %vm900, %v904, %v887
    %v907 = vld [vmem:[%s1 + $0x2f] sm:$0x1]
    %vm908 = vcmp.eq.s32.totalorder %v12, 47
    %vm909 = vcmp.eq.s32.totalorder %v13, 47
    %v910 = vsel %vm908, 1, 0
    %v911 = vsel %vm909, 1, 0
    %912 = vset.pattern.permute.xlu0 0
    %913 = vperm.xlu0 %912, %v910
    %v914 = vpop.permute.xlu0 %913
    %915 = vset.pattern.permute.xlu0 0
    %916 = vperm.xlu0 %915, %v911
    %v917 = vpop.permute.xlu0 %916
    %vm918 = vcmp.eq.s32.totalorder %v914, 1
    %vm919 = vcmp.eq.s32.totalorder %v917, 1
    %v920 = vlaneseq
    %v921 = vshrl.u32 %v920, 7
    %v922 = vsub.s32 0, %v921
    %v923 = vrot.slane %v907, %v922
    %v924 = vsel %vm918, %v923, %v905
    %v925 = vsel %vm919, %v923, %v906
    %v926 = vld [vmem:[%s1 + $0x30] sm:$0x1]
    %vm927 = vcmp.eq.s32.totalorder %v12, 48
    %vm928 = vcmp.eq.s32.totalorder %v13, 48
    %v929 = vsel %vm927, 1, 0
    %v930 = vsel %vm928, 1, 0
    %931 = vset.pattern.permute.xlu0 0
    %932 = vperm.xlu0 %931, %v929
    %v933 = vpop.permute.xlu0 %932
    %934 = vset.pattern.permute.xlu0 0
    %935 = vperm.xlu0 %934, %v930
    %v936 = vpop.permute.xlu0 %935
    %vm937 = vcmp.eq.s32.totalorder %v933, 1
    %vm938 = vcmp.eq.s32.totalorder %v936, 1
    %v939 = vlaneseq
    %v940 = vshrl.u32 %v939, 7
    %v941 = vsub.s32 0, %v940
    %v942 = vrot.slane %v926, %v941
    %v943 = vsel %vm937, %v942, %v924
    %v944 = vsel %vm938, %v942, %v925
    %v945 = vld [vmem:[%s1 + $0x31] sm:$0x1]
    %vm946 = vcmp.eq.s32.totalorder %v12, 49
    %vm947 = vcmp.eq.s32.totalorder %v13, 49
    %v948 = vsel %vm946, 1, 0
    %v949 = vsel %vm947, 1, 0
    %950 = vset.pattern.permute.xlu0 0
    %951 = vperm.xlu0 %950, %v948
    %v952 = vpop.permute.xlu0 %951
    %953 = vset.pattern.permute.xlu0 0
    %954 = vperm.xlu0 %953, %v949
    %v955 = vpop.permute.xlu0 %954
    %vm956 = vcmp.eq.s32.totalorder %v952, 1
    %vm957 = vcmp.eq.s32.totalorder %v955, 1
    %v958 = vlaneseq
    %v959 = vshrl.u32 %v958, 7
    %v960 = vsub.s32 0, %v959
    %v961 = vrot.slane %v945, %v960
    %v962 = vsel %vm956, %v961, %v943
    %v963 = vsel %vm957, %v961, %v944
    %v964 = vld [vmem:[%s1 + $0x32] sm:$0x1]
    %vm965 = vcmp.eq.s32.totalorder %v12, 50
    %vm966 = vcmp.eq.s32.totalorder %v13, 50
    %v967 = vsel %vm965, 1, 0
    %v968 = vsel %vm966, 1, 0
    %969 = vset.pattern.permute.xlu0 0
    %970 = vperm.xlu0 %969, %v967
    %v971 = vpop.permute.xlu0 %970
    %972 = vset.pattern.permute.xlu0 0
    %973 = vperm.xlu0 %972, %v968
    %v974 = vpop.permute.xlu0 %973
    %vm975 = vcmp.eq.s32.totalorder %v971, 1
    %vm976 = vcmp.eq.s32.totalorder %v974, 1
    %v977 = vlaneseq
    %v978 = vshrl.u32 %v977, 7
    %v979 = vsub.s32 0, %v978
    %v980 = vrot.slane %v964, %v979
    %v981 = vsel %vm975, %v980, %v962
    %v982 = vsel %vm976, %v980, %v963
    %v983 = vld [vmem:[%s1 + $0x33] sm:$0x1]
    %vm984 = vcmp.eq.s32.totalorder %v12, 51
    %vm985 = vcmp.eq.s32.totalorder %v13, 51
    %v986 = vsel %vm984, 1, 0
    %v987 = vsel %vm985, 1, 0
    %988 = vset.pattern.permute.xlu0 0
    %989 = vperm.xlu0 %988, %v986
    %v990 = vpop.permute.xlu0 %989
    %991 = vset.pattern.permute.xlu0 0
    %992 = vperm.xlu0 %991, %v987
    %v993 = vpop.permute.xlu0 %992
    %vm994 = vcmp.eq.s32.totalorder %v990, 1
    %vm995 = vcmp.eq.s32.totalorder %v993, 1
    %v996 = vlaneseq
    %v997 = vshrl.u32 %v996, 7
    %v998 = vsub.s32 0, %v997
    %v999 = vrot.slane %v983, %v998
    %v1000 = vsel %vm994, %v999, %v981
    %v1001 = vsel %vm995, %v999, %v982
    %v1002 = vld [vmem:[%s1 + $0x34] sm:$0x1]
    %vm1003 = vcmp.eq.s32.totalorder %v12, 52
    %vm1004 = vcmp.eq.s32.totalorder %v13, 52
    %v1005 = vsel %vm1003, 1, 0
    %v1006 = vsel %vm1004, 1, 0
    %1007 = vset.pattern.permute.xlu0 0
    %1008 = vperm.xlu0 %1007, %v1005
    %v1009 = vpop.permute.xlu0 %1008
    %1010 = vset.pattern.permute.xlu0 0
    %1011 = vperm.xlu0 %1010, %v1006
    %v1012 = vpop.permute.xlu0 %1011
    %vm1013 = vcmp.eq.s32.totalorder %v1009, 1
    %vm1014 = vcmp.eq.s32.totalorder %v1012, 1
    %v1015 = vlaneseq
    %v1016 = vshrl.u32 %v1015, 7
    %v1017 = vsub.s32 0, %v1016
    %v1018 = vrot.slane %v1002, %v1017
    %v1019 = vsel %vm1013, %v1018, %v1000
    %v1020 = vsel %vm1014, %v1018, %v1001
    %v1021 = vld [vmem:[%s1 + $0x35] sm:$0x1]
    %vm1022 = vcmp.eq.s32.totalorder %v12, 53
    %vm1023 = vcmp.eq.s32.totalorder %v13, 53
    %v1024 = vsel %vm1022, 1, 0
    %v1025 = vsel %vm1023, 1, 0
    %1026 = vset.pattern.permute.xlu0 0
    %1027 = vperm.xlu0 %1026, %v1024
    %v1028 = vpop.permute.xlu0 %1027
    %1029 = vset.pattern.permute.xlu0 0
    %1030 = vperm.xlu0 %1029, %v1025
    %v1031 = vpop.permute.xlu0 %1030
    %vm1032 = vcmp.eq.s32.totalorder %v1028, 1
    %vm1033 = vcmp.eq.s32.totalorder %v1031, 1
    %v1034 = vlaneseq
    %v1035 = vshrl.u32 %v1034, 7
    %v1036 = vsub.s32 0, %v1035
    %v1037 = vrot.slane %v1021, %v1036
    %v1038 = vsel %vm1032, %v1037, %v1019
    %v1039 = vsel %vm1033, %v1037, %v1020
    %v1040 = vld [vmem:[%s1 + $0x36] sm:$0x1]
    %vm1041 = vcmp.eq.s32.totalorder %v12, 54
    %vm1042 = vcmp.eq.s32.totalorder %v13, 54
    %v1043 = vsel %vm1041, 1, 0
    %v1044 = vsel %vm1042, 1, 0
    %1045 = vset.pattern.permute.xlu0 0
    %1046 = vperm.xlu0 %1045, %v1043
    %v1047 = vpop.permute.xlu0 %1046
    %1048 = vset.pattern.permute.xlu0 0
    %1049 = vperm.xlu0 %1048, %v1044
    %v1050 = vpop.permute.xlu0 %1049
    %vm1051 = vcmp.eq.s32.totalorder %v1047, 1
    %vm1052 = vcmp.eq.s32.totalorder %v1050, 1
    %v1053 = vlaneseq
    %v1054 = vshrl.u32 %v1053, 7
    %v1055 = vsub.s32 0, %v1054
    %v1056 = vrot.slane %v1040, %v1055
    %v1057 = vsel %vm1051, %v1056, %v1038
    %v1058 = vsel %vm1052, %v1056, %v1039
    %v1059 = vld [vmem:[%s1 + $0x37] sm:$0x1]
    %vm1060 = vcmp.eq.s32.totalorder %v12, 55
    %vm1061 = vcmp.eq.s32.totalorder %v13, 55
    %v1062 = vsel %vm1060, 1, 0
    %v1063 = vsel %vm1061, 1, 0
    %1064 = vset.pattern.permute.xlu0 0
    %1065 = vperm.xlu0 %1064, %v1062
    %v1066 = vpop.permute.xlu0 %1065
    %1067 = vset.pattern.permute.xlu0 0
    %1068 = vperm.xlu0 %1067, %v1063
    %v1069 = vpop.permute.xlu0 %1068
    %vm1070 = vcmp.eq.s32.totalorder %v1066, 1
    %vm1071 = vcmp.eq.s32.totalorder %v1069, 1
    %v1072 = vlaneseq
    %v1073 = vshrl.u32 %v1072, 7
    %v1074 = vsub.s32 0, %v1073
    %v1075 = vrot.slane %v1059, %v1074
    %v1076 = vsel %vm1070, %v1075, %v1057
    %v1077 = vsel %vm1071, %v1075, %v1058
    %v1078 = vld [vmem:[%s1 + $0x38] sm:$0x1]
    %vm1079 = vcmp.eq.s32.totalorder %v12, 56
    %vm1080 = vcmp.eq.s32.totalorder %v13, 56
    %v1081 = vsel %vm1079, 1, 0
    %v1082 = vsel %vm1080, 1, 0
    %1083 = vset.pattern.permute.xlu0 0
    %1084 = vperm.xlu0 %1083, %v1081
    %v1085 = vpop.permute.xlu0 %1084
    %1086 = vset.pattern.permute.xlu0 0
    %1087 = vperm.xlu0 %1086, %v1082
    %v1088 = vpop.permute.xlu0 %1087
    %vm1089 = vcmp.eq.s32.totalorder %v1085, 1
    %vm1090 = vcmp.eq.s32.totalorder %v1088, 1
    %v1091 = vlaneseq
    %v1092 = vshrl.u32 %v1091, 7
    %v1093 = vsub.s32 0, %v1092
    %v1094 = vrot.slane %v1078, %v1093
    %v1095 = vsel %vm1089, %v1094, %v1076
    %v1096 = vsel %vm1090, %v1094, %v1077
    %v1097 = vld [vmem:[%s1 + $0x39] sm:$0x1]
    %vm1098 = vcmp.eq.s32.totalorder %v12, 57
    %vm1099 = vcmp.eq.s32.totalorder %v13, 57
    %v1100 = vsel %vm1098, 1, 0
    %v1101 = vsel %vm1099, 1, 0
    %1102 = vset.pattern.permute.xlu0 0
    %1103 = vperm.xlu0 %1102, %v1100
    %v1104 = vpop.permute.xlu0 %1103
    %1105 = vset.pattern.permute.xlu0 0
    %1106 = vperm.xlu0 %1105, %v1101
    %v1107 = vpop.permute.xlu0 %1106
    %vm1108 = vcmp.eq.s32.totalorder %v1104, 1
    %vm1109 = vcmp.eq.s32.totalorder %v1107, 1
    %v1110 = vlaneseq
    %v1111 = vshrl.u32 %v1110, 7
    %v1112 = vsub.s32 0, %v1111
    %v1113 = vrot.slane %v1097, %v1112
    %v1114 = vsel %vm1108, %v1113, %v1095
    %v1115 = vsel %vm1109, %v1113, %v1096
    %v1116 = vld [vmem:[%s1 + $0x3a] sm:$0x1]
    %vm1117 = vcmp.eq.s32.totalorder %v12, 58
    %vm1118 = vcmp.eq.s32.totalorder %v13, 58
    %v1119 = vsel %vm1117, 1, 0
    %v1120 = vsel %vm1118, 1, 0
    %1121 = vset.pattern.permute.xlu0 0
    %1122 = vperm.xlu0 %1121, %v1119
    %v1123 = vpop.permute.xlu0 %1122
    %1124 = vset.pattern.permute.xlu0 0
    %1125 = vperm.xlu0 %1124, %v1120
    %v1126 = vpop.permute.xlu0 %1125
    %vm1127 = vcmp.eq.s32.totalorder %v1123, 1
    %vm1128 = vcmp.eq.s32.totalorder %v1126, 1
    %v1129 = vlaneseq
    %v1130 = vshrl.u32 %v1129, 7
    %v1131 = vsub.s32 0, %v1130
    %v1132 = vrot.slane %v1116, %v1131
    %v1133 = vsel %vm1127, %v1132, %v1114
    %v1134 = vsel %vm1128, %v1132, %v1115
    %v1135 = vld [vmem:[%s1 + $0x3b] sm:$0x1]
    %vm1136 = vcmp.eq.s32.totalorder %v12, 59
    %vm1137 = vcmp.eq.s32.totalorder %v13, 59
    %v1138 = vsel %vm1136, 1, 0
    %v1139 = vsel %vm1137, 1, 0
    %1140 = vset.pattern.permute.xlu0 0
    %1141 = vperm.xlu0 %1140, %v1138
    %v1142 = vpop.permute.xlu0 %1141
    %1143 = vset.pattern.permute.xlu0 0
    %1144 = vperm.xlu0 %1143, %v1139
    %v1145 = vpop.permute.xlu0 %1144
    %vm1146 = vcmp.eq.s32.totalorder %v1142, 1
    %vm1147 = vcmp.eq.s32.totalorder %v1145, 1
    %v1148 = vlaneseq
    %v1149 = vshrl.u32 %v1148, 7
    %v1150 = vsub.s32 0, %v1149
    %v1151 = vrot.slane %v1135, %v1150
    %v1152 = vsel %vm1146, %v1151, %v1133
    %v1153 = vsel %vm1147, %v1151, %v1134
    %v1154 = vld [vmem:[%s1 + $0x3c] sm:$0x1]
    %vm1155 = vcmp.eq.s32.totalorder %v12, 60
    %vm1156 = vcmp.eq.s32.totalorder %v13, 60
    %v1157 = vsel %vm1155, 1, 0
    %v1158 = vsel %vm1156, 1, 0
    %1159 = vset.pattern.permute.xlu0 0
    %1160 = vperm.xlu0 %1159, %v1157
    %v1161 = vpop.permute.xlu0 %1160
    %1162 = vset.pattern.permute.xlu0 0
    %1163 = vperm.xlu0 %1162, %v1158
    %v1164 = vpop.permute.xlu0 %1163
    %vm1165 = vcmp.eq.s32.totalorder %v1161, 1
    %vm1166 = vcmp.eq.s32.totalorder %v1164, 1
    %v1167 = vlaneseq
    %v1168 = vshrl.u32 %v1167, 7
    %v1169 = vsub.s32 0, %v1168
    %v1170 = vrot.slane %v1154, %v1169
    %v1171 = vsel %vm1165, %v1170, %v1152
    %v1172 = vsel %vm1166, %v1170, %v1153
    %v1173 = vld [vmem:[%s1 + $0x3d] sm:$0x1]
    %vm1174 = vcmp.eq.s32.totalorder %v12, 61
    %vm1175 = vcmp.eq.s32.totalorder %v13, 61
    %v1176 = vsel %vm1174, 1, 0
    %v1177 = vsel %vm1175, 1, 0
    %1178 = vset.pattern.permute.xlu0 0
    %1179 = vperm.xlu0 %1178, %v1176
    %v1180 = vpop.permute.xlu0 %1179
    %1181 = vset.pattern.permute.xlu0 0
    %1182 = vperm.xlu0 %1181, %v1177
    %v1183 = vpop.permute.xlu0 %1182
    %vm1184 = vcmp.eq.s32.totalorder %v1180, 1
    %vm1185 = vcmp.eq.s32.totalorder %v1183, 1
    %v1186 = vlaneseq
    %v1187 = vshrl.u32 %v1186, 7
    %v1188 = vsub.s32 0, %v1187
    %v1189 = vrot.slane %v1173, %v1188
    %v1190 = vsel %vm1184, %v1189, %v1171
    %v1191 = vsel %vm1185, %v1189, %v1172
    %v1192 = vld [vmem:[%s1 + $0x3e] sm:$0x1]
    %vm1193 = vcmp.eq.s32.totalorder %v12, 62
    %vm1194 = vcmp.eq.s32.totalorder %v13, 62
    %v1195 = vsel %vm1193, 1, 0
    %v1196 = vsel %vm1194, 1, 0
    %1197 = vset.pattern.permute.xlu0 0
    %1198 = vperm.xlu0 %1197, %v1195
    %v1199 = vpop.permute.xlu0 %1198
    %1200 = vset.pattern.permute.xlu0 0
    %1201 = vperm.xlu0 %1200, %v1196
    %v1202 = vpop.permute.xlu0 %1201
    %vm1203 = vcmp.eq.s32.totalorder %v1199, 1
    %vm1204 = vcmp.eq.s32.totalorder %v1202, 1
    %v1205 = vlaneseq
    %v1206 = vshrl.u32 %v1205, 7
    %v1207 = vsub.s32 0, %v1206
    %v1208 = vrot.slane %v1192, %v1207
    %v1209 = vsel %vm1203, %v1208, %v1190
    %v1210 = vsel %vm1204, %v1208, %v1191
    %v1211 = vld [vmem:[%s1 + $0x3f] sm:$0x1]
    %vm1212 = vcmp.eq.s32.totalorder %v12, 63
    %vm1213 = vcmp.eq.s32.totalorder %v13, 63
    %v1214 = vsel %vm1212, 1, 0
    %v1215 = vsel %vm1213, 1, 0
    %1216 = vset.pattern.permute.xlu0 0
    %1217 = vperm.xlu0 %1216, %v1214
    %v1218 = vpop.permute.xlu0 %1217
    %1219 = vset.pattern.permute.xlu0 0
    %1220 = vperm.xlu0 %1219, %v1215
    %v1221 = vpop.permute.xlu0 %1220
    %vm1222 = vcmp.eq.s32.totalorder %v1218, 1
    %vm1223 = vcmp.eq.s32.totalorder %v1221, 1
    %v1224 = vlaneseq
    %v1225 = vshrl.u32 %v1224, 7
    %v1226 = vsub.s32 0, %v1225
    %v1227 = vrot.slane %v1211, %v1226
    %v1228 = vsel %vm1222, %v1227, %v1209
    %v1229 = vsel %vm1223, %v1227, %v1210
    %vm1230 = vcmask 334848
    %1231 = vst.msk [vmem:[#allocation2] sm:$0xff] %vm1230, %v1228
    %1232 = vst.msk [vmem:[#allocation2 + $0x8] sm:$0xff] %vm1230, %v1229
    // Predicated region
    $region10: #{embedding_forward.1} parent=1 // pred_check
      _
    $region11: #{embedding_forward.1} parent=1 // pred_check_branch
      %1234 = sbr.rel (0) target = $region13
    $region12: #{embedding_forward.1} parent=1 // pred_region
      %s1236 = ssub.s32 256, 256
      %1237 = vsyncadd [#allocation3], %s1236
      %s1238 = sshll.u32 [#allocation2], 4
      %s1239 = int_to_ptr.vmem [resolvable:$true] %s1238
      %1244 = dma.vmem_to_hbm [thread:$0]  %s1239, 256, %s2, [#allocation3], 128, 128, 8
    $region13: #{embedding_forward.1} parent=1 // pred_fallthru
      _
    // Predicated region
    $region14: #{embedding_forward.1} parent=1 // pred_check
      _
    $region15: #{embedding_forward.1} parent=1 // pred_check_branch
      %1246 = sbr.rel (0) target = $region17
    $region16: #{embedding_forward.1} parent=1 // pred_region
      %1247 = dma.done [#allocation3], 256
    $region17: #{embedding_forward.1} parent=1 // pred_fallthru
      _
    %1248 = vsyncpa [#allocation3], 1

</llo_original>
